<compile_context>
chip_gen: v6e
topology: v6e:2x2x1
jax: 0.10.0
libtpu: 0.0.40
codegen_flags: <defaults>
</compile_context>

<pallas_src>
import functools
import math

import jax
import jax.numpy as jnp
from jax import lax
from jax.experimental import pallas as pl
from jax.experimental.pallas import tpu as pltpu


def _layer_norm(x, gamma, beta, eps=1e-5):
    mu = jnp.mean(x, axis=-1, keepdims=True)
    var = jnp.mean((x - mu) ** 2, axis=-1, keepdims=True)
    return (x - mu) * lax.rsqrt(var + eps) * gamma + beta


def ut_encoder_kernel(
    x_ref,
    wqkv_ref, bqkv_ref, wo_ref, bo_ref,
    ln1_g_ref, ln1_b_ref,
    w1_ref, b1_ref, w2_ref, b2_ref,
    ln2_g_ref, ln2_b_ref,
    out_ref,
    *, n_layers: int, n_heads: int, bt: int, seq: int, d_model: int,
):
    S, D = seq, d_model
    dh = D // n_heads
    M = bt * S

    # Flatten (bt, S, D) -> (bt*S, D): the QKV / FFN matmuls present M = bt*S rows
    # to the MXU instead of S rows per tiny matmul.
    x0 = x_ref[...].reshape(M, D)

    def layer(_, x):
        xb = x.astype(jnp.bfloat16)

        # ---- Fused QKV projection: one [M,D]@[D,3D] pass, f32 accumulation.
        # 1/sqrt(dh) is already folded into wq / bq host-side.
        qkv = jnp.dot(xb, wqkv_ref[...],
                      preferred_element_type=jnp.float32) + bqkv_ref[...]
        q = qkv[:, :D].astype(jnp.bfloat16)
        k = qkv[:, D:2 * D].astype(jnp.bfloat16)
        v = qkv[:, 2 * D:].astype(jnp.bfloat16)

        # ---- Multi-head self-attention (full [S,S] score tile per batch element).
        # Heads are concatenated and projected with a single [M,D]@[D,D] matmul.
        # TODO(synk): sub-128-lane head slices cost XLU relayouts when dh < 128;
        # acceptable while MXU-bound.
        rows = []
        for b in range(bt):                      # static unroll over small bt
            r0 = b * S
            heads = []
            for h in range(n_heads):             # static unroll over small H
                c0 = h * dh
                qh = q[r0:r0 + S, c0:c0 + dh]
                kh = k[r0:r0 + S, c0:c0 + dh]
                vh = v[r0:r0 + S, c0:c0 + dh]
                s = jnp.dot(qh, kh.T, preferred_element_type=jnp.float32)  # [S,S]
                s = s - jnp.max(s, axis=-1, keepdims=True)
                p = jnp.exp(s)                                             # f32 EUP
                p = p * pl.reciprocal(jnp.sum(p, axis=-1, keepdims=True),
                                      approx=True)
                heads.append(jnp.dot(p.astype(jnp.bfloat16), vh,
                                     preferred_element_type=jnp.float32))  # [S,dh]
            rows.append(jnp.concatenate(heads, axis=-1))                   # [S,D]
        ctx = jnp.concatenate(rows, axis=0) if bt > 1 else rows[0]         # [M,D]

        attn = jnp.dot(ctx.astype(jnp.bfloat16), wo_ref[...],
                       preferred_element_type=jnp.float32) + bo_ref[...]

        # ---- Add & LayerNorm 1 (post-norm), f32.
        h1 = _layer_norm(x + attn, ln1_g_ref[...], ln1_b_ref[...])

        # ---- Feed-forward (ReLU): bf16 matmuls, f32 accumulation.
        ff = jnp.dot(h1.astype(jnp.bfloat16), w1_ref[...],
                     preferred_element_type=jnp.float32) + b1_ref[...]
        ff = jnp.maximum(ff, 0.0)
        ff = jnp.dot(ff.astype(jnp.bfloat16), w2_ref[...],
                     preferred_element_type=jnp.float32) + b2_ref[...]

        # ---- Add & LayerNorm 2.
        return _layer_norm(h1 + ff, ln2_g_ref[...], ln2_b_ref[...])

    xn = lax.fori_loop(0, n_layers, layer, x0)
    out_ref[...] = xn.reshape(bt, S, D)


def prepare_params(params, n_heads):
    """One-time host-side prep: fold attention scale into wq/bq, pack QKV weights,
    and cast weight matrices to bf16 (keep biases / LN params in f32)."""
    D = params["wq"].shape[0]
    dh = D // n_heads
    scale = 1.0 / math.sqrt(dh)
    wqkv = jnp.concatenate([params["wq"] * scale, params["wk"], params["wv"]], axis=1)
    bqkv = jnp.concatenate([params["bq"] * scale, params["bk"], params["bv"]], axis=1)
    return {
        "wqkv": wqkv.astype(jnp.bfloat16),
        "bqkv": bqkv.astype(jnp.float32),
        "wo": params["wo"].astype(jnp.bfloat16),
        "bo": params["bo"].astype(jnp.float32),
        "ln1_g": params["ln1_g"], "ln1_b": params["ln1_b"],
        "w1": params["w1"].astype(jnp.bfloat16), "b1": params["b1"],
        "w2": params["w2"].astype(jnp.bfloat16), "b2": params["b2"],
        "ln2_g": params["ln2_g"], "ln2_b": params["ln2_b"],
    }


def _pick_batch_block(B, S, max_rows=256):
    """Largest bt dividing B with bt*S <= max_rows while keeping >=2 parallel grid
    blocks when B >= 2 (v7x has 2 TCs sharded via the 'parallel' axis)."""
    min_blocks = 2 if B >= 2 else 1
    bt = 1
    for cand in range(1, B + 1):
        if B % cand == 0 and B // cand >= min_blocks and cand * S <= max_rows:
            bt = cand
    return bt


def universal_transformer_encoder(x, packed, n_layers, n_heads, *,
                                  batch_block=None,
                                  vmem_limit_bytes=48 * 1024 * 1024):
    """Apply the SAME encoder layer (shared weights) n_layers times, in ONE kernel."""
    B, S, D = x.shape
    FF = packed["w1"].shape[1]
    bt = batch_block if batch_block is not None else _pick_batch_block(B, S)
    assert B % bt == 0

    kern = functools.partial(ut_encoder_kernel, n_layers=n_layers, n_heads=n_heads,
                             bt=bt, seq=S, d_model=D)

    act_spec = pl.BlockSpec((bt, S, D), lambda i: (i, 0, 0))
    # Constant-index weights/biases: fetched once; single-buffered so the pipeline
    # does not allocate a never-used second VMEM copy (critical on v7x, 64 MiB VMEM).
    const = lambda r, c: pl.BlockSpec((r, c), lambda i: (0, 0),
                                      pipeline_mode=pl.Buffered(1))

    in_specs = [
        act_spec,
        const(D, 3 * D), const(1, 3 * D),                     # wqkv (bf16), bqkv
        const(D, D), const(1, D),                             # wo (bf16), bo
        const(1, D), const(1, D),                             # ln1 gamma/beta
        const(D, FF), const(1, FF), const(FF, D), const(1, D),# w1 b1 w2 b2
        const(1, D), const(1, D),                             # ln2 gamma/beta
    ]

    return pl.pallas_call(
        kern,
        out_shape=jax.ShapeDtypeStruct((B, S, D), jnp.float32),
        grid=(B // bt,),
        in_specs=in_specs,
        out_specs=act_spec,
        compiler_params=pltpu.CompilerParams(
            dimension_semantics=("parallel",),
            # TODO(synk): re-derive when scaling S/D: v7x has 64 MiB physical VMEM,
            # v5e/v6e have 128 MiB (raise the cap there for bigger tiles).
            vmem_limit_bytes=vmem_limit_bytes,
        ),
    )(
        x,
        packed["wqkv"], packed["bqkv"], packed["wo"], packed["bo"],
        packed["ln1_g"], packed["ln1_b"],
        packed["w1"], packed["b1"], packed["w2"], packed["b2"],
        packed["ln2_g"], packed["ln2_b"],
    )


def init_params(key, D, FF):
    ks = jax.random.split(key, 6)
    s = 1.0 / math.sqrt(D)
    return {
        "wq": jax.random.normal(ks[0], (D, D), jnp.float32) * s,
        "wk": jax.random.normal(ks[1], (D, D), jnp.float32) * s,
        "wv": jax.random.normal(ks[2], (D, D), jnp.float32) * s,
        "wo": jax.random.normal(ks[3], (D, D), jnp.float32) * s,
        "bq": jnp.zeros((1, D), jnp.float32),
        "bk": jnp.zeros((1, D), jnp.float32),
        "bv": jnp.zeros((1, D), jnp.float32),
        "bo": jnp.zeros((1, D), jnp.float32),
        "ln1_g": jnp.ones((1, D), jnp.float32),
        "ln1_b": jnp.zeros((1, D), jnp.float32),
        "w1": jax.random.normal(ks[4], (D, FF), jnp.float32) * s,
        "b1": jnp.zeros((1, FF), jnp.float32),
        "w2": jax.random.normal(ks[5], (FF, D), jnp.float32) * (1.0 / math.sqrt(FF)),
        "b2": jnp.zeros((1, D), jnp.float32),
        "ln2_g": jnp.ones((1, D), jnp.float32),
        "ln2_b": jnp.zeros((1, D), jnp.float32),
    }


if __name__ == "__main__":
    B, S, D, FF, H = 2, 8, 32, 64, 4
    N_LAYERS = 3

    key = jax.random.PRNGKey(0)
    k_x, k_p = jax.random.split(key)
    x = jax.random.normal(k_x, (B, S, D), jnp.float32)
    params = init_params(k_p, D, FF)
    packed = prepare_params(params, H)          # one-time host-side prep (bf16 cast,
                                                # QKV packing, scale folding)

    out = universal_transformer_encoder(x, packed, N_LAYERS, H)
    out = jax.block_until_ready(out)
    assert out.shape == (B, S, D)
    assert bool(jnp.isfinite(out).all())
    print("KERNEL_OK")
</pallas_src>

<mosaic_0001>
module attributes {stable_mosaic.version = 11 : i64} {
  func.func @ut_encoder_kernel(%arg0: i32, %arg1: memref<1x8x32xf32, #tpu.memory_space<vmem>>, %arg2: memref<32x96xbf16, #tpu.memory_space<vmem>>, %arg3: memref<1x96xf32, #tpu.memory_space<vmem>>, %arg4: memref<32x32xbf16, #tpu.memory_space<vmem>>, %arg5: memref<1x32xf32, #tpu.memory_space<vmem>>, %arg6: memref<1x32xf32, #tpu.memory_space<vmem>>, %arg7: memref<1x32xf32, #tpu.memory_space<vmem>>, %arg8: memref<32x64xbf16, #tpu.memory_space<vmem>>, %arg9: memref<1x64xf32, #tpu.memory_space<vmem>>, %arg10: memref<64x32xbf16, #tpu.memory_space<vmem>>, %arg11: memref<1x32xf32, #tpu.memory_space<vmem>>, %arg12: memref<1x32xf32, #tpu.memory_space<vmem>>, %arg13: memref<1x32xf32, #tpu.memory_space<vmem>>, %arg14: memref<1x8x32xf32, #tpu.memory_space<vmem>>) attributes {dimension_semantics = [#tpu.dimension_semantics<parallel>], iteration_bounds = array<i64: 2>, scalar_prefetch = 0 : i64, scratch_operands = 0 : i64, tpu.core_type = #tpu.core_type<tc>, window_params = [{transform_indices = @transform_0, window_bounds = array<i64: 1, 8, 32>}, {pipeline_mode = #tpu.pipeline_mode<synchronous>, transform_indices = @transform_1, window_bounds = array<i64: 32, 96>}, {pipeline_mode = #tpu.pipeline_mode<synchronous>, transform_indices = @transform_2, window_bounds = array<i64: 1, 96>}, {pipeline_mode = #tpu.pipeline_mode<synchronous>, transform_indices = @transform_3, window_bounds = array<i64: 32, 32>}, {pipeline_mode = #tpu.pipeline_mode<synchronous>, transform_indices = @transform_4, window_bounds = array<i64: 1, 32>}, {pipeline_mode = #tpu.pipeline_mode<synchronous>, transform_indices = @transform_5, window_bounds = array<i64: 1, 32>}, {pipeline_mode = #tpu.pipeline_mode<synchronous>, transform_indices = @transform_6, window_bounds = array<i64: 1, 32>}, {pipeline_mode = #tpu.pipeline_mode<synchronous>, transform_indices = @transform_7, window_bounds = array<i64: 32, 64>}, {pipeline_mode = #tpu.pipeline_mode<synchronous>, transform_indices = @transform_8, window_bounds = array<i64: 1, 64>}, {pipeline_mode = #tpu.pipeline_mode<synchronous>, transform_indices = @transform_9, window_bounds = array<i64: 64, 32>}, {pipeline_mode = #tpu.pipeline_mode<synchronous>, transform_indices = @transform_10, window_bounds = array<i64: 1, 32>}, {pipeline_mode = #tpu.pipeline_mode<synchronous>, transform_indices = @transform_11, window_bounds = array<i64: 1, 32>}, {pipeline_mode = #tpu.pipeline_mode<synchronous>, transform_indices = @transform_12, window_bounds = array<i64: 1, 32>}, {transform_indices = @transform_13, window_bounds = array<i64: 1, 8, 32>}]} {
    %c0 = arith.constant 0 : index
    %c0_0 = arith.constant 0 : index
    %c0_1 = arith.constant 0 : index
    %0 = vector.load %arg1[%c0, %c0_0, %c0_1] : memref<1x8x32xf32, #tpu.memory_space<vmem>>, vector<1x8x32xf32>
    %1 = vector.shape_cast %0 : vector<1x8x32xf32> to vector<8x32xf32>
    %c0_i32 = arith.constant 0 : i32
    %c3_i32 = arith.constant 3 : i32
    %2 = arith.addi %c0_i32, %c3_i32 : i32
    %c1_i32 = arith.constant 1 : i32
    %3 = scf.for %arg15 = %c0_i32 to %2 step %c1_i32 iter_args(%arg16 = %1) -> (vector<8x32xf32>)  : i32 {
      %6 = arith.truncf %arg16 : vector<8x32xf32> to vector<8x32xbf16>
      %c0_5 = arith.constant 0 : index
      %c0_6 = arith.constant 0 : index
      %7 = vector.load %arg2[%c0_5, %c0_6] : memref<32x96xbf16, #tpu.memory_space<vmem>>, vector<32x96xbf16>
      %cst = arith.constant dense<0.000000e+00> : vector<8x96xf32>
      %8 = tpu.matmul %6, %7, %cst {dimension_numbers = #tpu.dot_dimension_numbers<[1], [0], [0], [1], [0, 0, 1, 1], [], []>} : vector<8x32xbf16>, vector<32x96xbf16>, vector<8x96xf32> -> vector<8x96xf32>
      %c0_7 = arith.constant 0 : index
      %c0_8 = arith.constant 0 : index
      %9 = vector.load %arg3[%c0_7, %c0_8] : memref<1x96xf32, #tpu.memory_space<vmem>>, vector<1x96xf32>
      %10 = vector.broadcast %9 : vector<1x96xf32> to vector<8x96xf32>
      %11 = arith.addf %8, %10 : vector<8x96xf32>
      %12 = vector.extract_strided_slice %11 {offsets = [0, 0], sizes = [8, 32], strides = [1, 1]} : vector<8x96xf32> to vector<8x32xf32>
      %13 = arith.truncf %12 : vector<8x32xf32> to vector<8x32xbf16>
      %14 = vector.extract_strided_slice %11 {offsets = [0, 32], sizes = [8, 32], strides = [1, 1]} : vector<8x96xf32> to vector<8x32xf32>
      %15 = arith.truncf %14 : vector<8x32xf32> to vector<8x32xbf16>
      %16 = vector.extract_strided_slice %11 {offsets = [0, 64], sizes = [8, 32], strides = [1, 1]} : vector<8x96xf32> to vector<8x32xf32>
      %17 = arith.truncf %16 : vector<8x32xf32> to vector<8x32xbf16>
      %18 = vector.extract_strided_slice %13 {offsets = [0, 0], sizes = [8, 8], strides = [1, 1]} : vector<8x32xbf16> to vector<8x8xbf16>
      %19 = vector.extract_strided_slice %15 {offsets = [0, 0], sizes = [8, 8], strides = [1, 1]} : vector<8x32xbf16> to vector<8x8xbf16>
      %20 = vector.extract_strided_slice %17 {offsets = [0, 0], sizes = [8, 8], strides = [1, 1]} : vector<8x32xbf16> to vector<8x8xbf16>
      %21 = tpu.transpose %19, [1, 0] : vector<8x8xbf16> -> vector<8x8xbf16>
      %cst_9 = arith.constant dense<0.000000e+00> : vector<8x8xf32>
      %22 = tpu.matmul %18, %21, %cst_9 {dimension_numbers = #tpu.dot_dimension_numbers<[1], [0], [0], [1], [0, 0, 1, 1], [], []>} : vector<8x8xbf16>, vector<8x8xbf16>, vector<8x8xf32> -> vector<8x8xf32>
      %cst_10 = arith.constant dense<0xFF800000> : vector<8xf32>
      %23 = vector.multi_reduction <maximumf>, %22, %cst_10 [1] : vector<8x8xf32> to vector<8xf32>
      %24 = vector.shape_cast %23 : vector<8xf32> to vector<8x1xf32>
      %25 = vector.broadcast %24 : vector<8x1xf32> to vector<8x8xf32>
      %26 = arith.subf %22, %25 : vector<8x8xf32>
      %27 = math.exp %26 : vector<8x8xf32>
      %cst_11 = arith.constant dense<0.000000e+00> : vector<8xf32>
      %28 = vector.multi_reduction <add>, %27, %cst_11 [1] : vector<8x8xf32> to vector<8xf32>
      %29 = vector.shape_cast %28 : vector<8xf32> to vector<8x1xf32>
      %30 = tpu.reciprocal %29 {approx = true} : vector<8x1xf32> -> vector<8x1xf32>
      %31 = vector.broadcast %30 : vector<8x1xf32> to vector<8x8xf32>
      %32 = arith.mulf %27, %31 : vector<8x8xf32>
      %33 = arith.truncf %32 : vector<8x8xf32> to vector<8x8xbf16>
      %cst_12 = arith.constant dense<0.000000e+00> : vector<8x8xf32>
      %34 = tpu.matmul %33, %20, %cst_12 {dimension_numbers = #tpu.dot_dimension_numbers<[1], [0], [0], [1], [0, 0, 1, 1], [], []>} : vector<8x8xbf16>, vector<8x8xbf16>, vector<8x8xf32> -> vector<8x8xf32>
      %35 = vector.extract_strided_slice %13 {offsets = [0, 8], sizes = [8, 8], strides = [1, 1]} : vector<8x32xbf16> to vector<8x8xbf16>
      %36 = vector.extract_strided_slice %15 {offsets = [0, 8], sizes = [8, 8], strides = [1, 1]} : vector<8x32xbf16> to vector<8x8xbf16>
      %37 = vector.extract_strided_slice %17 {offsets = [0, 8], sizes = [8, 8], strides = [1, 1]} : vector<8x32xbf16> to vector<8x8xbf16>
      %38 = tpu.transpose %36, [1, 0] : vector<8x8xbf16> -> vector<8x8xbf16>
      %cst_13 = arith.constant dense<0.000000e+00> : vector<8x8xf32>
      %39 = tpu.matmul %35, %38, %cst_13 {dimension_numbers = #tpu.dot_dimension_numbers<[1], [0], [0], [1], [0, 0, 1, 1], [], []>} : vector<8x8xbf16>, vector<8x8xbf16>, vector<8x8xf32> -> vector<8x8xf32>
      %cst_14 = arith.constant dense<0xFF800000> : vector<8xf32>
      %40 = vector.multi_reduction <maximumf>, %39, %cst_14 [1] : vector<8x8xf32> to vector<8xf32>
      %41 = vector.shape_cast %40 : vector<8xf32> to vector<8x1xf32>
      %42 = vector.broadcast %41 : vector<8x1xf32> to vector<8x8xf32>
      %43 = arith.subf %39, %42 : vector<8x8xf32>
      %44 = math.exp %43 : vector<8x8xf32>
      %cst_15 = arith.constant dense<0.000000e+00> : vector<8xf32>
      %45 = vector.multi_reduction <add>, %44, %cst_15 [1] : vector<8x8xf32> to vector<8xf32>
      %46 = vector.shape_cast %45 : vector<8xf32> to vector<8x1xf32>
      %47 = tpu.reciprocal %46 {approx = true} : vector<8x1xf32> -> vector<8x1xf32>
      %48 = vector.broadcast %47 : vector<8x1xf32> to vector<8x8xf32>
      %49 = arith.mulf %44, %48 : vector<8x8xf32>
      %50 = arith.truncf %49 : vector<8x8xf32> to vector<8x8xbf16>
      %cst_16 = arith.constant dense<0.000000e+00> : vector<8x8xf32>
      %51 = tpu.matmul %50, %37, %cst_16 {dimension_numbers = #tpu.dot_dimension_numbers<[1], [0], [0], [1], [0, 0, 1, 1], [], []>} : vector<8x8xbf16>, vector<8x8xbf16>, vector<8x8xf32> -> vector<8x8xf32>
      %52 = vector.extract_strided_slice %13 {offsets = [0, 16], sizes = [8, 8], strides = [1, 1]} : vector<8x32xbf16> to vector<8x8xbf16>
      %53 = vector.extract_strided_slice %15 {offsets = [0, 16], sizes = [8, 8], strides = [1, 1]} : vector<8x32xbf16> to vector<8x8xbf16>
      %54 = vector.extract_strided_slice %17 {offsets = [0, 16], sizes = [8, 8], strides = [1, 1]} : vector<8x32xbf16> to vector<8x8xbf16>
      %55 = tpu.transpose %53, [1, 0] : vector<8x8xbf16> -> vector<8x8xbf16>
      %cst_17 = arith.constant dense<0.000000e+00> : vector<8x8xf32>
      %56 = tpu.matmul %52, %55, %cst_17 {dimension_numbers = #tpu.dot_dimension_numbers<[1], [0], [0], [1], [0, 0, 1, 1], [], []>} : vector<8x8xbf16>, vector<8x8xbf16>, vector<8x8xf32> -> vector<8x8xf32>
      %cst_18 = arith.constant dense<0xFF800000> : vector<8xf32>
      %57 = vector.multi_reduction <maximumf>, %56, %cst_18 [1] : vector<8x8xf32> to vector<8xf32>
      %58 = vector.shape_cast %57 : vector<8xf32> to vector<8x1xf32>
      %59 = vector.broadcast %58 : vector<8x1xf32> to vector<8x8xf32>
      %60 = arith.subf %56, %59 : vector<8x8xf32>
      %61 = math.exp %60 : vector<8x8xf32>
      %cst_19 = arith.constant dense<0.000000e+00> : vector<8xf32>
      %62 = vector.multi_reduction <add>, %61, %cst_19 [1] : vector<8x8xf32> to vector<8xf32>
      %63 = vector.shape_cast %62 : vector<8xf32> to vector<8x1xf32>
      %64 = tpu.reciprocal %63 {approx = true} : vector<8x1xf32> -> vector<8x1xf32>
      %65 = vector.broadcast %64 : vector<8x1xf32> to vector<8x8xf32>
      %66 = arith.mulf %61, %65 : vector<8x8xf32>
      %67 = arith.truncf %66 : vector<8x8xf32> to vector<8x8xbf16>
      %cst_20 = arith.constant dense<0.000000e+00> : vector<8x8xf32>
      %68 = tpu.matmul %67, %54, %cst_20 {dimension_numbers = #tpu.dot_dimension_numbers<[1], [0], [0], [1], [0, 0, 1, 1], [], []>} : vector<8x8xbf16>, vector<8x8xbf16>, vector<8x8xf32> -> vector<8x8xf32>
      %69 = vector.extract_strided_slice %13 {offsets = [0, 24], sizes = [8, 8], strides = [1, 1]} : vector<8x32xbf16> to vector<8x8xbf16>
      %70 = vector.extract_strided_slice %15 {offsets = [0, 24], sizes = [8, 8], strides = [1, 1]} : vector<8x32xbf16> to vector<8x8xbf16>
      %71 = vector.extract_strided_slice %17 {offsets = [0, 24], sizes = [8, 8], strides = [1, 1]} : vector<8x32xbf16> to vector<8x8xbf16>
      %72 = tpu.transpose %70, [1, 0] : vector<8x8xbf16> -> vector<8x8xbf16>
      %cst_21 = arith.constant dense<0.000000e+00> : vector<8x8xf32>
      %73 = tpu.matmul %69, %72, %cst_21 {dimension_numbers = #tpu.dot_dimension_numbers<[1], [0], [0], [1], [0, 0, 1, 1], [], []>} : vector<8x8xbf16>, vector<8x8xbf16>, vector<8x8xf32> -> vector<8x8xf32>
      %cst_22 = arith.constant dense<0xFF800000> : vector<8xf32>
      %74 = vector.multi_reduction <maximumf>, %73, %cst_22 [1] : vector<8x8xf32> to vector<8xf32>
      %75 = vector.shape_cast %74 : vector<8xf32> to vector<8x1xf32>
      %76 = vector.broadcast %75 : vector<8x1xf32> to vector<8x8xf32>
      %77 = arith.subf %73, %76 : vector<8x8xf32>
      %78 = math.exp %77 : vector<8x8xf32>
      %cst_23 = arith.constant dense<0.000000e+00> : vector<8xf32>
      %79 = vector.multi_reduction <add>, %78, %cst_23 [1] : vector<8x8xf32> to vector<8xf32>
      %80 = vector.shape_cast %79 : vector<8xf32> to vector<8x1xf32>
      %81 = tpu.reciprocal %80 {approx = true} : vector<8x1xf32> -> vector<8x1xf32>
      %82 = vector.broadcast %81 : vector<8x1xf32> to vector<8x8xf32>
      %83 = arith.mulf %78, %82 : vector<8x8xf32>
      %84 = arith.truncf %83 : vector<8x8xf32> to vector<8x8xbf16>
      %cst_24 = arith.constant dense<0.000000e+00> : vector<8x8xf32>
      %85 = tpu.matmul %84, %71, %cst_24 {dimension_numbers = #tpu.dot_dimension_numbers<[1], [0], [0], [1], [0, 0, 1, 1], [], []>} : vector<8x8xbf16>, vector<8x8xbf16>, vector<8x8xf32> -> vector<8x8xf32>
      %86 = tpu.concatenate %34, %51, %68, %85 in 1 : vector<8x8xf32>, vector<8x8xf32>, vector<8x8xf32>, vector<8x8xf32> -> vector<8x32xf32>
      %87 = arith.truncf %86 : vector<8x32xf32> to vector<8x32xbf16>
      %c0_25 = arith.constant 0 : index
      %c0_26 = arith.constant 0 : index
      %88 = vector.load %arg4[%c0_25, %c0_26] : memref<32x32xbf16, #tpu.memory_space<vmem>>, vector<32x32xbf16>
      %cst_27 = arith.constant dense<0.000000e+00> : vector<8x32xf32>
      %89 = tpu.matmul %87, %88, %cst_27 {dimension_numbers = #tpu.dot_dimension_numbers<[1], [0], [0], [1], [0, 0, 1, 1], [], []>} : vector<8x32xbf16>, vector<32x32xbf16>, vector<8x32xf32> -> vector<8x32xf32>
      %c0_28 = arith.constant 0 : index
      %c0_29 = arith.constant 0 : index
      %90 = vector.load %arg5[%c0_28, %c0_29] : memref<1x32xf32, #tpu.memory_space<vmem>>, vector<1x32xf32>
      %91 = vector.broadcast %90 : vector<1x32xf32> to vector<8x32xf32>
      %92 = arith.addf %89, %91 : vector<8x32xf32>
      %93 = arith.addf %arg16, %92 : vector<8x32xf32>
      %c0_30 = arith.constant 0 : index
      %c0_31 = arith.constant 0 : index
      %94 = vector.load %arg6[%c0_30, %c0_31] : memref<1x32xf32, #tpu.memory_space<vmem>>, vector<1x32xf32>
      %c0_32 = arith.constant 0 : index
      %c0_33 = arith.constant 0 : index
      %95 = vector.load %arg7[%c0_32, %c0_33] : memref<1x32xf32, #tpu.memory_space<vmem>>, vector<1x32xf32>
      %cst_34 = arith.constant dense<0.000000e+00> : vector<8xf32>
      %96 = vector.multi_reduction <add>, %93, %cst_34 [1] : vector<8x32xf32> to vector<8xf32>
      %97 = vector.shape_cast %96 : vector<8xf32> to vector<8x1xf32>
      %cst_35 = arith.constant 3.200000e+01 : f32
      %98 = vector.broadcast %cst_35 : f32 to vector<8x1xf32>
      %99 = arith.divf %97, %98 : vector<8x1xf32>
      %100 = vector.broadcast %99 : vector<8x1xf32> to vector<8x32xf32>
      %101 = arith.subf %93, %100 : vector<8x32xf32>
      %102 = arith.mulf %101, %101 : vector<8x32xf32>
      %cst_36 = arith.constant dense<0.000000e+00> : vector<8xf32>
      %103 = vector.multi_reduction <add>, %102, %cst_36 [1] : vector<8x32xf32> to vector<8xf32>
      %104 = vector.shape_cast %103 : vector<8xf32> to vector<8x1xf32>
      %cst_37 = arith.constant 3.200000e+01 : f32
      %105 = vector.broadcast %cst_37 : f32 to vector<8x1xf32>
      %106 = arith.divf %104, %105 : vector<8x1xf32>
      %107 = vector.broadcast %99 : vector<8x1xf32> to vector<8x32xf32>
      %108 = arith.subf %93, %107 : vector<8x32xf32>
      %cst_38 = arith.constant 9.99999974E-6 : f32
      %109 = vector.broadcast %cst_38 : f32 to vector<8x1xf32>
      %110 = arith.addf %106, %109 : vector<8x1xf32>
      %111 = math.rsqrt %110 : vector<8x1xf32>
      %112 = vector.broadcast %111 : vector<8x1xf32> to vector<8x32xf32>
      %113 = arith.mulf %108, %112 : vector<8x32xf32>
      %114 = vector.broadcast %94 : vector<1x32xf32> to vector<8x32xf32>
      %115 = arith.mulf %113, %114 : vector<8x32xf32>
      %116 = vector.broadcast %95 : vector<1x32xf32> to vector<8x32xf32>
      %117 = arith.addf %115, %116 : vector<8x32xf32>
      %118 = arith.truncf %117 : vector<8x32xf32> to vector<8x32xbf16>
      %c0_39 = arith.constant 0 : index
      %c0_40 = arith.constant 0 : index
      %119 = vector.load %arg8[%c0_39, %c0_40] : memref<32x64xbf16, #tpu.memory_space<vmem>>, vector<32x64xbf16>
      %cst_41 = arith.constant dense<0.000000e+00> : vector<8x64xf32>
      %120 = tpu.matmul %118, %119, %cst_41 {dimension_numbers = #tpu.dot_dimension_numbers<[1], [0], [0], [1], [0, 0, 1, 1], [], []>} : vector<8x32xbf16>, vector<32x64xbf16>, vector<8x64xf32> -> vector<8x64xf32>
      %c0_42 = arith.constant 0 : index
      %c0_43 = arith.constant 0 : index
      %121 = vector.load %arg9[%c0_42, %c0_43] : memref<1x64xf32, #tpu.memory_space<vmem>>, vector<1x64xf32>
      %122 = vector.broadcast %121 : vector<1x64xf32> to vector<8x64xf32>
      %123 = arith.addf %120, %122 : vector<8x64xf32>
      %cst_44 = arith.constant 0.000000e+00 : f32
      %124 = vector.broadcast %cst_44 : f32 to vector<8x64xf32>
      %125 = arith.maximumf %123, %124 : vector<8x64xf32>
      %126 = arith.truncf %125 : vector<8x64xf32> to vector<8x64xbf16>
      %c0_45 = arith.constant 0 : index
      %c0_46 = arith.constant 0 : index
      %127 = vector.load %arg10[%c0_45, %c0_46] : memref<64x32xbf16, #tpu.memory_space<vmem>>, vector<64x32xbf16>
      %cst_47 = arith.constant dense<0.000000e+00> : vector<8x32xf32>
      %128 = tpu.matmul %126, %127, %cst_47 {dimension_numbers = #tpu.dot_dimension_numbers<[1], [0], [0], [1], [0, 0, 1, 1], [], []>} : vector<8x64xbf16>, vector<64x32xbf16>, vector<8x32xf32> -> vector<8x32xf32>
      %c0_48 = arith.constant 0 : index
      %c0_49 = arith.constant 0 : index
      %129 = vector.load %arg11[%c0_48, %c0_49] : memref<1x32xf32, #tpu.memory_space<vmem>>, vector<1x32xf32>
      %130 = vector.broadcast %129 : vector<1x32xf32> to vector<8x32xf32>
      %131 = arith.addf %128, %130 : vector<8x32xf32>
      %132 = arith.addf %117, %131 : vector<8x32xf32>
      %c0_50 = arith.constant 0 : index
      %c0_51 = arith.constant 0 : index
      %133 = vector.load %arg12[%c0_50, %c0_51] : memref<1x32xf32, #tpu.memory_space<vmem>>, vector<1x32xf32>
      %c0_52 = arith.constant 0 : index
      %c0_53 = arith.constant 0 : index
      %134 = vector.load %arg13[%c0_52, %c0_53] : memref<1x32xf32, #tpu.memory_space<vmem>>, vector<1x32xf32>
      %cst_54 = arith.constant dense<0.000000e+00> : vector<8xf32>
      %135 = vector.multi_reduction <add>, %132, %cst_54 [1] : vector<8x32xf32> to vector<8xf32>
      %136 = vector.shape_cast %135 : vector<8xf32> to vector<8x1xf32>
      %cst_55 = arith.constant 3.200000e+01 : f32
      %137 = vector.broadcast %cst_55 : f32 to vector<8x1xf32>
      %138 = arith.divf %136, %137 : vector<8x1xf32>
      %139 = vector.broadcast %138 : vector<8x1xf32> to vector<8x32xf32>
      %140 = arith.subf %132, %139 : vector<8x32xf32>
      %141 = arith.mulf %140, %140 : vector<8x32xf32>
      %cst_56 = arith.constant dense<0.000000e+00> : vector<8xf32>
      %142 = vector.multi_reduction <add>, %141, %cst_56 [1] : vector<8x32xf32> to vector<8xf32>
      %143 = vector.shape_cast %142 : vector<8xf32> to vector<8x1xf32>
      %cst_57 = arith.constant 3.200000e+01 : f32
      %144 = vector.broadcast %cst_57 : f32 to vector<8x1xf32>
      %145 = arith.divf %143, %144 : vector<8x1xf32>
      %146 = vector.broadcast %138 : vector<8x1xf32> to vector<8x32xf32>
      %147 = arith.subf %132, %146 : vector<8x32xf32>
      %cst_58 = arith.constant 9.99999974E-6 : f32
      %148 = vector.broadcast %cst_58 : f32 to vector<8x1xf32>
      %149 = arith.addf %145, %148 : vector<8x1xf32>
      %150 = math.rsqrt %149 : vector<8x1xf32>
      %151 = vector.broadcast %150 : vector<8x1xf32> to vector<8x32xf32>
      %152 = arith.mulf %147, %151 : vector<8x32xf32>
      %153 = vector.broadcast %133 : vector<1x32xf32> to vector<8x32xf32>
      %154 = arith.mulf %152, %153 : vector<8x32xf32>
      %155 = vector.broadcast %134 : vector<1x32xf32> to vector<8x32xf32>
      %156 = arith.addf %154, %155 : vector<8x32xf32>
      scf.yield %156 : vector<8x32xf32>
    }
    %4 = vector.shape_cast %3 : vector<8x32xf32> to vector<1x8x32xf32>
    %c0_2 = arith.constant 0 : index
    %c0_3 = arith.constant 0 : index
    %c0_4 = arith.constant 0 : index
    %5 = vector.load %arg14[%c0_2, %c0_3, %c0_4] : memref<1x8x32xf32, #tpu.memory_space<vmem>>, vector<1x8x32xf32>
    tpu.vector_store %arg14[%c0_2, %c0_3, %c0_4], %4 {strides = array<i32>} : memref<1x8x32xf32, #tpu.memory_space<vmem>>, vector<1x8x32xf32>,
    return
  }
  func.func @transform_0(%arg0: i32) -> (i32, i32, i32) {
    %c0_i32 = arith.constant 0 : i32
    %c0_i32_0 = arith.constant 0 : i32
    %c0_i32_1 = arith.constant 0 : i32
    return %arg0, %c0_i32, %c0_i32_0 : i32, i32, i32
  }
  func.func @transform_1(%arg0: i32) -> (i32, i32) {
    %c0_i32 = arith.constant 0 : i32
    %c0_i32_0 = arith.constant 0 : i32
    %c0_i32_1 = arith.constant 0 : i32
    return %c0_i32, %c0_i32_0 : i32, i32
  }
  func.func @transform_2(%arg0: i32) -> (i32, i32) {
    %c0_i32 = arith.constant 0 : i32
    %c0_i32_0 = arith.constant 0 : i32
    %c0_i32_1 = arith.constant 0 : i32
    return %c0_i32, %c0_i32_0 : i32, i32
  }
  func.func @transform_3(%arg0: i32) -> (i32, i32) {
    %c0_i32 = arith.constant 0 : i32
    %c0_i32_0 = arith.constant 0 : i32
    %c0_i32_1 = arith.constant 0 : i32
    return %c0_i32, %c0_i32_0 : i32, i32
  }
  func.func @transform_4(%arg0: i32) -> (i32, i32) {
    %c0_i32 = arith.constant 0 : i32
    %c0_i32_0 = arith.constant 0 : i32
    %c0_i32_1 = arith.constant 0 : i32
    return %c0_i32, %c0_i32_0 : i32, i32
  }
  func.func @transform_5(%arg0: i32) -> (i32, i32) {
    %c0_i32 = arith.constant 0 : i32
    %c0_i32_0 = arith.constant 0 : i32
    %c0_i32_1 = arith.constant 0 : i32
    return %c0_i32, %c0_i32_0 : i32, i32
  }
  func.func @transform_6(%arg0: i32) -> (i32, i32) {
    %c0_i32 = arith.constant 0 : i32
    %c0_i32_0 = arith.constant 0 : i32
    %c0_i32_1 = arith.constant 0 : i32
    return %c0_i32, %c0_i32_0 : i32, i32
  }
  func.func @transform_7(%arg0: i32) -> (i32, i32) {
    %c0_i32 = arith.constant 0 : i32
    %c0_i32_0 = arith.constant 0 : i32
    %c0_i32_1 = arith.constant 0 : i32
    return %c0_i32, %c0_i32_0 : i32, i32
  }
  func.func @transform_8(%arg0: i32) -> (i32, i32) {
    %c0_i32 = arith.constant 0 : i32
    %c0_i32_0 = arith.constant 0 : i32
    %c0_i32_1 = arith.constant 0 : i32
    return %c0_i32, %c0_i32_0 : i32, i32
  }
  func.func @transform_9(%arg0: i32) -> (i32, i32) {
    %c0_i32 = arith.constant 0 : i32
    %c0_i32_0 = arith.constant 0 : i32
    %c0_i32_1 = arith.constant 0 : i32
    return %c0_i32, %c0_i32_0 : i32, i32
  }
  func.func @transform_10(%arg0: i32) -> (i32, i32) {
    %c0_i32 = arith.constant 0 : i32
    %c0_i32_0 = arith.constant 0 : i32
    %c0_i32_1 = arith.constant 0 : i32
    return %c0_i32, %c0_i32_0 : i32, i32
  }
  func.func @transform_11(%arg0: i32) -> (i32, i32) {
    %c0_i32 = arith.constant 0 : i32
    %c0_i32_0 = arith.constant 0 : i32
    %c0_i32_1 = arith.constant 0 : i32
    return %c0_i32, %c0_i32_0 : i32, i32
  }
  func.func @transform_12(%arg0: i32) -> (i32, i32) {
    %c0_i32 = arith.constant 0 : i32
    %c0_i32_0 = arith.constant 0 : i32
    %c0_i32_1 = arith.constant 0 : i32
    return %c0_i32, %c0_i32_0 : i32, i32
  }
  func.func @transform_13(%arg0: i32) -> (i32, i32, i32) {
    %c0_i32 = arith.constant 0 : i32
    %c0_i32_0 = arith.constant 0 : i32
    %c0_i32_1 = arith.constant 0 : i32
    return %arg0, %c0_i32, %c0_i32_0 : i32, i32, i32
  }
}

</mosaic_0001>

<llo_original>
// kernel: tpu_custom_call.1
$region0: #{tpu_custom_call.1}
  #allocation0 [shape = 'u32[]', space=smem, size = 0x4, offset = 0x4, fixed_abs, tag = 'smem constant byte address 0x4 - core index']
  #allocation1 [shape = 'u32[144,128]{1,0:T(1,128)}', space=vmem, size = 0x12000, scoped, tag = 'internal scratch']
  %s0 = inlined_call_operand.vmem [shape: f32[2,8,32], index: 0, kind: input, shape index: {}]
  %s1 = inlined_call_operand.vmem [shape: bf16[32,96], index: 1, kind: input, shape index: {}]
  %s2 = inlined_call_operand.hbm [shape: f32[1,96], index: 2, kind: input, shape index: {}]
  %s3 = inlined_call_operand.vmem [shape: bf16[32,32], index: 3, kind: input, shape index: {}]
  %s4 = inlined_call_operand.hbm [shape: f32[1,32], index: 4, kind: input, shape index: {}]
  %s5 = inlined_call_operand.hbm [shape: f32[1,32], index: 5, kind: input, shape index: {}]
  %s6 = inlined_call_operand.hbm [shape: f32[1,32], index: 6, kind: input, shape index: {}]
  %s7 = inlined_call_operand.hbm [shape: bf16[32,64], index: 7, kind: input, shape index: {}]
  %s8 = inlined_call_operand.hbm [shape: f32[1,64], index: 8, kind: input, shape index: {}]
  %s9 = inlined_call_operand.vmem [shape: bf16[64,32], index: 9, kind: input, shape index: {}]
  %s10 = inlined_call_operand.vmem [shape: f32[1,32], index: 10, kind: input, shape index: {}]
  %s11 = inlined_call_operand.vmem [shape: f32[1,32], index: 11, kind: input, shape index: {}]
  %s12 = inlined_call_operand.vmem [shape: f32[1,32], index: 12, kind: input, shape index: {}]
  %s13 = inlined_call_operand.hbm [shape: f32[2,8,32], index: 13, kind: output, shape index: {}]
  %s14 = sld [smem:[#allocation0]]
  $region116: #{tpu_custom_call.1} parent=0
    _
  %s16 = ssub.s32 1, %s14
  %s17 = scalar_select 0, %s16, %s14
  $region1: #{tpu_custom_call.1} parent=0
    #allocation2 [shape = 'u8[512]{0}', space=vmem, size = 0x400, scoped, tag = 'input window, operand 2, single buffered']
    #allocation3 [shape = 's32[2]{0}', space=sflag, size = 0x8, scoped, tag = 'scoped memory for tpu_custom_call.1']
    #allocation4 [shape = 's32[2]{0}', space=sflag, size = 0x8, scoped, tag = 'scoped memory for tpu_custom_call.1']
    #allocation5 [shape = 'u8[512]{0}', space=vmem, size = 0x400, scoped, tag = 'input window, operand 4, single buffered']
    #allocation6 [shape = 's32[1]{0}', space=sflag, size = 0x4, scoped, tag = 'scoped memory for tpu_custom_call.1']
    #allocation7 [shape = 'u8[512]{0}', space=vmem, size = 0x400, scoped, tag = 'input window, operand 5, single buffered']
    #allocation8 [shape = 'u8[512]{0}', space=vmem, size = 0x400, scoped, tag = 'input window, operand 6, single buffered']
    #allocation9 [shape = 's32[1]{0}', space=sflag, size = 0x4, scoped, tag = 'scoped memory for tpu_custom_call.1']
    #allocation10 [shape = 'u8[8192]{0}', space=vmem, size = 0x2000, scoped, tag = 'input window, operand 7, single buffered']
    #allocation11 [shape = 'u8[512]{0}', space=vmem, size = 0x400, scoped, tag = 'input window, operand 8, single buffered']
    #allocation12 [shape = 's32[1]{0}', space=sflag, size = 0x4, scoped, tag = 'scoped memory for tpu_custom_call.1']
    #allocation13 [shape = 'u8[8192]{0}', space=vmem, size = 0x2000, scoped, tag = 'output window, operand 0']
    %18 = vsyncpa [#allocation3], 0
    %19 = vsyncpa [#allocation6], 0
    %20 = vsyncpa [#allocation9], 0
    %21 = vsyncpa [#allocation12], 0
    %22 = vsyncpa [#allocation4], 0
    %s23 = scalar_lea.sflag [#allocation4], 1
    %24 = vsyncpa %s23, 0
    loop: start=0, step=1, limit=4
    $region2: #{tpu_custom_call.1} parent=1 // loop_pre_header
      _
    $region3: #{tpu_custom_call.1} parent=1 // loop_header
      %s26 = sphi 0, %s30
      %p27 = scmp.ge.s32.totalorder %s26, 4
      %s36 = sphi 0, %s38
      %s39 = sphi 0, %s36
      %s40 = sphi 0, %s39
      %s56 = sphi 0, %s40
      %s60 = sphi 0, %s60
      %s62 = sphi 0, %s60
      %s63 = sphi 0, %s62
      %s77 = sphi 0, %s63
      %s81 = sphi 0, %s81
      %s83 = sphi 0, %s81
      %s84 = sphi 0, %s83
      %s98 = sphi 0, %s84
      %s102 = sphi 0, %s102
      %s104 = sphi 0, %s102
      %s105 = sphi 0, %s104
      %s119 = sphi 0, %s105
      %s123 = sphi 0, %s123
      %s125 = sphi 0, %s123
      %s126 = sphi 0, %s125
      %s140 = sphi 0, %s126
      %s144 = sphi 0, %s144
      %s146 = sphi 0, %s144
      %s147 = sphi 0, %s146
      %s161 = sphi 0, %s147
      %s165 = sphi 0, %s165
      %s167 = sphi 0, %s165
      %s168 = sphi 0, %s167
      %s182 = sphi 0, %s168
      %s186 = sphi 0, %s186
      %s188 = sphi 0, %s186
      %s189 = sphi 0, %s188
      %s203 = sphi 0, %s189
      %s207 = sphi 0, %s207
      %s209 = sphi 0, %s207
      %s210 = sphi 0, %s209
      %s224 = sphi 0, %s210
      %s228 = sphi 0, %s228
      %s230 = sphi 0, %s228
      %s231 = sphi 0, %s230
      %s245 = sphi 0, %s231
      %s249 = sphi 0, %s249
      %s251 = sphi 0, %s249
      %s252 = sphi 0, %s251
      %s266 = sphi 0, %s252
      %s270 = sphi 0, %s270
      %s272 = sphi 0, %s270
      %s273 = sphi 0, %s272
      %s287 = sphi 0, %s273
      %s291 = sphi 0, %s291
      %s293 = sphi 0, %s291
      %s294 = sphi 0, %s293
      %s308 = sphi 0, %s294
      %s314 = sphi 0, %s316
      %s317 = sphi 0, %s314
      %s318 = sphi 0, %s317
      %s334 = sphi 0, %s318
    $region4: #{tpu_custom_call.1} parent=1 // loop_header_branch
      %29 = sbr.rel (%p27) target = $region8
    $region5: #{tpu_custom_call.1} parent=1 // loop_body
      %s31 = ssub.s32 %s26, 1
      %s32 = ssub.s32 %s26, 2
      %s33 = sadd.s32 %s26, 1
      %s34 = ssub.s32 %s26, %s33
      %p35 = scmp.eq.s32.totalorder %s34, 0
      %s37 = sadd.s32 %s36, 1
      %s38 = scalar_select %p35, %s36, %s37
      %p41 = pneg %p35
      %p42 = scmp.eq.s32.totalorder %s26, 1
      %p43 = por %p41, %p42
      %p44 = scmp.ne.s32.totalorder %s36, %s39
      %p45 = scmp.eq.s32.totalorder %s26, 0
      %p46 = por %p44, %p45
      %p47 = scmp.ne.s32.totalorder %s36, %s39
      %p48 = scmp.eq.s32.totalorder %s31, 1
      %p49 = por %p47, %p48
      %p50 = scmp.ne.s32.totalorder %s39, %s40
      %p51 = scmp.eq.s32.totalorder %s31, 0
      %p52 = por %p50, %p51
      %p53 = scmp.ne.s32.totalorder %s39, %s40
      %p54 = scmp.eq.s32.totalorder %s32, 1
      %p55 = por %p53, %p54
      %p57 = scmp.ne.s32.totalorder %s40, %s56
      %p58 = scmp.eq.s32.totalorder %s32, 0
      %p59 = por %p57, %p58
      %s61 = sadd.s32 %s60, 1
      %p64 = scmp.eq.s32.totalorder %s26, 1
      %p65 = scmp.ne.s32.totalorder %s60, %s62
      %p66 = scmp.eq.s32.totalorder %s26, 0
      %p67 = por %p65, %p66
      %p68 = scmp.ne.s32.totalorder %s60, %s62
      %p69 = scmp.eq.s32.totalorder %s31, 1
      %p70 = por %p68, %p69
      %p71 = scmp.ne.s32.totalorder %s62, %s63
      %p72 = scmp.eq.s32.totalorder %s31, 0
      %p73 = por %p71, %p72
      %p74 = scmp.ne.s32.totalorder %s62, %s63
      %p75 = scmp.eq.s32.totalorder %s32, 1
      %p76 = por %p74, %p75
      %p78 = scmp.ne.s32.totalorder %s63, %s77
      %p79 = scmp.eq.s32.totalorder %s32, 0
      %p80 = por %p78, %p79
      %s82 = sadd.s32 %s81, 1
      %p85 = scmp.eq.s32.totalorder %s26, 1
      %p86 = scmp.ne.s32.totalorder %s81, %s83
      %p87 = scmp.eq.s32.totalorder %s26, 0
      %p88 = por %p86, %p87
      %p89 = scmp.ne.s32.totalorder %s81, %s83
      %p90 = scmp.eq.s32.totalorder %s31, 1
      %p91 = por %p89, %p90
      %p92 = scmp.ne.s32.totalorder %s83, %s84
      %p93 = scmp.eq.s32.totalorder %s31, 0
      %p94 = por %p92, %p93
      %p95 = scmp.ne.s32.totalorder %s83, %s84
      %p96 = scmp.eq.s32.totalorder %s32, 1
      %p97 = por %p95, %p96
      %p99 = scmp.ne.s32.totalorder %s84, %s98
      %p100 = scmp.eq.s32.totalorder %s32, 0
      %p101 = por %p99, %p100
      %s103 = sadd.s32 %s102, 1
      %p106 = scmp.eq.s32.totalorder %s26, 1
      %p107 = scmp.ne.s32.totalorder %s102, %s104
      %p108 = scmp.eq.s32.totalorder %s26, 0
      %p109 = por %p107, %p108
      %p110 = scmp.ne.s32.totalorder %s102, %s104
      %p111 = scmp.eq.s32.totalorder %s31, 1
      %p112 = por %p110, %p111
      %p113 = scmp.ne.s32.totalorder %s104, %s105
      %p114 = scmp.eq.s32.totalorder %s31, 0
      %p115 = por %p113, %p114
      %p116 = scmp.ne.s32.totalorder %s104, %s105
      %p117 = scmp.eq.s32.totalorder %s32, 1
      %p118 = por %p116, %p117
      %p120 = scmp.ne.s32.totalorder %s105, %s119
      %p121 = scmp.eq.s32.totalorder %s32, 0
      %p122 = por %p120, %p121
      %s124 = sadd.s32 %s123, 1
      %p127 = scmp.eq.s32.totalorder %s26, 1
      %p128 = scmp.ne.s32.totalorder %s123, %s125
      %p129 = scmp.eq.s32.totalorder %s26, 0
      %p130 = por %p128, %p129
      %p131 = scmp.ne.s32.totalorder %s123, %s125
      %p132 = scmp.eq.s32.totalorder %s31, 1
      %p133 = por %p131, %p132
      %p134 = scmp.ne.s32.totalorder %s125, %s126
      %p135 = scmp.eq.s32.totalorder %s31, 0
      %p136 = por %p134, %p135
      %p137 = scmp.ne.s32.totalorder %s125, %s126
      %p138 = scmp.eq.s32.totalorder %s32, 1
      %p139 = por %p137, %p138
      %p141 = scmp.ne.s32.totalorder %s126, %s140
      %p142 = scmp.eq.s32.totalorder %s32, 0
      %p143 = por %p141, %p142
      %s145 = sadd.s32 %s144, 1
      %p148 = scmp.eq.s32.totalorder %s26, 1
      %p149 = scmp.ne.s32.totalorder %s144, %s146
      %p150 = scmp.eq.s32.totalorder %s26, 0
      %p151 = por %p149, %p150
      %p152 = scmp.ne.s32.totalorder %s144, %s146
      %p153 = scmp.eq.s32.totalorder %s31, 1
      %p154 = por %p152, %p153
      %p155 = scmp.ne.s32.totalorder %s146, %s147
      %p156 = scmp.eq.s32.totalorder %s31, 0
      %p157 = por %p155, %p156
      %p158 = scmp.ne.s32.totalorder %s146, %s147
      %p159 = scmp.eq.s32.totalorder %s32, 1
      %p160 = por %p158, %p159
      %p162 = scmp.ne.s32.totalorder %s147, %s161
      %p163 = scmp.eq.s32.totalorder %s32, 0
      %p164 = por %p162, %p163
      %s166 = sadd.s32 %s165, 1
      %p169 = scmp.eq.s32.totalorder %s26, 1
      %p170 = scmp.ne.s32.totalorder %s165, %s167
      %p171 = scmp.eq.s32.totalorder %s26, 0
      %p172 = por %p170, %p171
      %p173 = scmp.ne.s32.totalorder %s165, %s167
      %p174 = scmp.eq.s32.totalorder %s31, 1
      %p175 = por %p173, %p174
      %p176 = scmp.ne.s32.totalorder %s167, %s168
      %p177 = scmp.eq.s32.totalorder %s31, 0
      %p178 = por %p176, %p177
      %p179 = scmp.ne.s32.totalorder %s167, %s168
      %p180 = scmp.eq.s32.totalorder %s32, 1
      %p181 = por %p179, %p180
      %p183 = scmp.ne.s32.totalorder %s168, %s182
      %p184 = scmp.eq.s32.totalorder %s32, 0
      %p185 = por %p183, %p184
      %s187 = sadd.s32 %s186, 1
      %p190 = scmp.eq.s32.totalorder %s26, 1
      %p191 = scmp.ne.s32.totalorder %s186, %s188
      %p192 = scmp.eq.s32.totalorder %s26, 0
      %p193 = por %p191, %p192
      %p194 = scmp.ne.s32.totalorder %s186, %s188
      %p195 = scmp.eq.s32.totalorder %s31, 1
      %p196 = por %p194, %p195
      %p197 = scmp.ne.s32.totalorder %s188, %s189
      %p198 = scmp.eq.s32.totalorder %s31, 0
      %p199 = por %p197, %p198
      %p200 = scmp.ne.s32.totalorder %s188, %s189
      %p201 = scmp.eq.s32.totalorder %s32, 1
      %p202 = por %p200, %p201
      %p204 = scmp.ne.s32.totalorder %s189, %s203
      %p205 = scmp.eq.s32.totalorder %s32, 0
      %p206 = por %p204, %p205
      %s208 = sadd.s32 %s207, 1
      %p211 = scmp.eq.s32.totalorder %s26, 1
      %p212 = scmp.ne.s32.totalorder %s207, %s209
      %p213 = scmp.eq.s32.totalorder %s26, 0
      %p214 = por %p212, %p213
      %p215 = scmp.ne.s32.totalorder %s207, %s209
      %p216 = scmp.eq.s32.totalorder %s31, 1
      %p217 = por %p215, %p216
      %p218 = scmp.ne.s32.totalorder %s209, %s210
      %p219 = scmp.eq.s32.totalorder %s31, 0
      %p220 = por %p218, %p219
      %p221 = scmp.ne.s32.totalorder %s209, %s210
      %p222 = scmp.eq.s32.totalorder %s32, 1
      %p223 = por %p221, %p222
      %p225 = scmp.ne.s32.totalorder %s210, %s224
      %p226 = scmp.eq.s32.totalorder %s32, 0
      %p227 = por %p225, %p226
      %s229 = sadd.s32 %s228, 1
      %p232 = scmp.eq.s32.totalorder %s26, 1
      %p233 = scmp.ne.s32.totalorder %s228, %s230
      %p234 = scmp.eq.s32.totalorder %s26, 0
      %p235 = por %p233, %p234
      %p236 = scmp.ne.s32.totalorder %s228, %s230
      %p237 = scmp.eq.s32.totalorder %s31, 1
      %p238 = por %p236, %p237
      %p239 = scmp.ne.s32.totalorder %s230, %s231
      %p240 = scmp.eq.s32.totalorder %s31, 0
      %p241 = por %p239, %p240
      %p242 = scmp.ne.s32.totalorder %s230, %s231
      %p243 = scmp.eq.s32.totalorder %s32, 1
      %p244 = por %p242, %p243
      %p246 = scmp.ne.s32.totalorder %s231, %s245
      %p247 = scmp.eq.s32.totalorder %s32, 0
      %p248 = por %p246, %p247
      %s250 = sadd.s32 %s249, 1
      %p253 = scmp.eq.s32.totalorder %s26, 1
      %p254 = scmp.ne.s32.totalorder %s249, %s251
      %p255 = scmp.eq.s32.totalorder %s26, 0
      %p256 = por %p254, %p255
      %p257 = scmp.ne.s32.totalorder %s249, %s251
      %p258 = scmp.eq.s32.totalorder %s31, 1
      %p259 = por %p257, %p258
      %p260 = scmp.ne.s32.totalorder %s251, %s252
      %p261 = scmp.eq.s32.totalorder %s31, 0
      %p262 = por %p260, %p261
      %p263 = scmp.ne.s32.totalorder %s251, %s252
      %p264 = scmp.eq.s32.totalorder %s32, 1
      %p265 = por %p263, %p264
      %p267 = scmp.ne.s32.totalorder %s252, %s266
      %p268 = scmp.eq.s32.totalorder %s32, 0
      %p269 = por %p267, %p268
      %s271 = sadd.s32 %s270, 1
      %p274 = scmp.eq.s32.totalorder %s26, 1
      %p275 = scmp.ne.s32.totalorder %s270, %s272
      %p276 = scmp.eq.s32.totalorder %s26, 0
      %p277 = por %p275, %p276
      %p278 = scmp.ne.s32.totalorder %s270, %s272
      %p279 = scmp.eq.s32.totalorder %s31, 1
      %p280 = por %p278, %p279
      %p281 = scmp.ne.s32.totalorder %s272, %s273
      %p282 = scmp.eq.s32.totalorder %s31, 0
      %p283 = por %p281, %p282
      %p284 = scmp.ne.s32.totalorder %s272, %s273
      %p285 = scmp.eq.s32.totalorder %s32, 1
      %p286 = por %p284, %p285
      %p288 = scmp.ne.s32.totalorder %s273, %s287
      %p289 = scmp.eq.s32.totalorder %s32, 0
      %p290 = por %p288, %p289
      %s292 = sadd.s32 %s291, 1
      %p295 = scmp.eq.s32.totalorder %s26, 1
      %p296 = scmp.ne.s32.totalorder %s291, %s293
      %p297 = scmp.eq.s32.totalorder %s26, 0
      %p298 = por %p296, %p297
      %p299 = scmp.ne.s32.totalorder %s291, %s293
      %p300 = scmp.eq.s32.totalorder %s31, 1
      %p301 = por %p299, %p300
      %p302 = scmp.ne.s32.totalorder %s293, %s294
      %p303 = scmp.eq.s32.totalorder %s31, 0
      %p304 = por %p302, %p303
      %p305 = scmp.ne.s32.totalorder %s293, %s294
      %p306 = scmp.eq.s32.totalorder %s32, 1
      %p307 = por %p305, %p306
      %p309 = scmp.ne.s32.totalorder %s294, %s308
      %p310 = scmp.eq.s32.totalorder %s32, 0
      %p311 = por %p309, %p310
      %s312 = ssub.s32 %s26, %s33
      %p313 = scmp.eq.s32.totalorder %s312, 0
      %s315 = sadd.s32 %s314, 1
      %s316 = scalar_select %p313, %s314, %s315
      %p319 = pneg %p313
      %p320 = scmp.eq.s32.totalorder %s26, 1
      %p321 = por %p319, %p320
      %p322 = scmp.ne.s32.totalorder %s314, %s317
      %p323 = scmp.eq.s32.totalorder %s26, 0
      %p324 = por %p322, %p323
      %p325 = scmp.ne.s32.totalorder %s314, %s317
      %p326 = scmp.eq.s32.totalorder %s31, 1
      %p327 = por %p325, %p326
      %p328 = scmp.ne.s32.totalorder %s317, %s318
      %p329 = scmp.eq.s32.totalorder %s31, 0
      %p330 = por %p328, %p329
      %p331 = scmp.ne.s32.totalorder %s317, %s318
      %p332 = scmp.eq.s32.totalorder %s32, 1
      %p333 = por %p331, %p332
      %p335 = scmp.ne.s32.totalorder %s318, %s334
      %p336 = scmp.eq.s32.totalorder %s32, 0
      %p337 = por %p335, %p336
      %p338 = scmp.le.s32.totalorder 1, %s26
      %p339 = scmp.lt.s32.totalorder %s26, 3
      %p340 = pnand %p338, %p339
      %p341 = pneg %p340
      // Predicated region
      $region9: #{tpu_custom_call.1} parent=5 // pred_check
        _
      $region10: #{tpu_custom_call.1} parent=5 // pred_check_branch
        %343 = sbr.rel (%p340) target = $region12
      $region11: #{tpu_custom_call.1} parent=5 // pred_region
        %s344 = ssub.s32 %s26, 1
        // Predicated region
        $region13: #{tpu_custom_call.1} parent=11 // pred_check
          %p345 = pneg %p73
        $region14: #{tpu_custom_call.1} parent=11 // pred_check_branch
          %347 = sbr.rel (%p345) target = $region16
        $region15: #{tpu_custom_call.1} parent=11 // pred_region
          _
        $region16: #{tpu_custom_call.1} parent=11 // pred_fallthru
          _
        // Predicated region
        $region17: #{tpu_custom_call.1} parent=11 // pred_check
          %p348 = pneg %p94
        $region18: #{tpu_custom_call.1} parent=11 // pred_check_branch
          %350 = sbr.rel (%p348) target = $region20
        $region19: #{tpu_custom_call.1} parent=11 // pred_region
          %s352 = ssub.s32 16, 16
          %353 = vsyncadd [#allocation3], %s352
          %s355 = sshll.u32 [#allocation2], 4
          %s356 = int_to_ptr.vmem [resolvable:$true] %s355
          %358 = dma.hbm_to_vmem [thread:$0]  %s2, 16, %s356, [#allocation3]
        $region20: #{tpu_custom_call.1} parent=11 // pred_fallthru
          _
        // Predicated region
        $region21: #{tpu_custom_call.1} parent=11 // pred_check
          %p359 = pneg %p115
        $region22: #{tpu_custom_call.1} parent=11 // pred_check_branch
          %361 = sbr.rel (%p359) target = $region24
        $region23: #{tpu_custom_call.1} parent=11 // pred_region
          _
        $region24: #{tpu_custom_call.1} parent=11 // pred_fallthru
          _
        // Predicated region
        $region25: #{tpu_custom_call.1} parent=11 // pred_check
          %p362 = pneg %p136
        $region26: #{tpu_custom_call.1} parent=11 // pred_check_branch
          %364 = sbr.rel (%p362) target = $region28
        $region27: #{tpu_custom_call.1} parent=11 // pred_region
          %s366 = ssub.s32 16, 16
          %367 = vsyncadd [#allocation6], %s366
          %s369 = sshll.u32 [#allocation5], 4
          %s370 = int_to_ptr.vmem [resolvable:$true] %s369
          %372 = dma.hbm_to_vmem [thread:$0]  %s4, 16, %s370, [#allocation6]
        $region28: #{tpu_custom_call.1} parent=11 // pred_fallthru
          _
        // Predicated region
        $region29: #{tpu_custom_call.1} parent=11 // pred_check
          %p373 = pneg %p157
        $region30: #{tpu_custom_call.1} parent=11 // pred_check_branch
          %375 = sbr.rel (%p373) target = $region32
        $region31: #{tpu_custom_call.1} parent=11 // pred_region
          %s377 = ssub.s32 16, 16
          %378 = vsyncadd [#allocation6], %s377
          %s380 = sshll.u32 [#allocation7], 4
          %s381 = int_to_ptr.vmem [resolvable:$true] %s380
          %383 = dma.hbm_to_vmem [thread:$0]  %s5, 16, %s381, [#allocation6]
        $region32: #{tpu_custom_call.1} parent=11 // pred_fallthru
          _
        // Predicated region
        $region33: #{tpu_custom_call.1} parent=11 // pred_check
          %p384 = pneg %p178
        $region34: #{tpu_custom_call.1} parent=11 // pred_check_branch
          %386 = sbr.rel (%p384) target = $region36
        $region35: #{tpu_custom_call.1} parent=11 // pred_region
          %s388 = ssub.s32 16, 16
          %389 = vsyncadd [#allocation9], %s388
          %s391 = sshll.u32 [#allocation8], 4
          %s392 = int_to_ptr.vmem [resolvable:$true] %s391
          %394 = dma.hbm_to_vmem [thread:$0]  %s6, 16, %s392, [#allocation9]
        $region36: #{tpu_custom_call.1} parent=11 // pred_fallthru
          _
        // Predicated region
        $region37: #{tpu_custom_call.1} parent=11 // pred_check
          %p395 = pneg %p199
        $region38: #{tpu_custom_call.1} parent=11 // pred_check_branch
          %397 = sbr.rel (%p395) target = $region40
        $region39: #{tpu_custom_call.1} parent=11 // pred_region
          %s399 = ssub.s32 256, 256
          %400 = vsyncadd [#allocation9], %s399
          %s401 = sshll.u32 [#allocation10], 4
          %s402 = int_to_ptr.vmem [resolvable:$true] %s401
          %407 = dma.hbm_to_vmem [thread:$0]  %s7, 256, %s402, [#allocation9], 64, 64, 4
        $region40: #{tpu_custom_call.1} parent=11 // pred_fallthru
          _
        // Predicated region
        $region41: #{tpu_custom_call.1} parent=11 // pred_check
          %p408 = pneg %p220
        $region42: #{tpu_custom_call.1} parent=11 // pred_check_branch
          %410 = sbr.rel (%p408) target = $region44
        $region43: #{tpu_custom_call.1} parent=11 // pred_region
          %s412 = ssub.s32 16, 16
          %413 = vsyncadd [#allocation12], %s412
          %s415 = sshll.u32 [#allocation11], 4
          %s416 = int_to_ptr.vmem [resolvable:$true] %s415
          %418 = dma.hbm_to_vmem [thread:$0]  %s8, 16, %s416, [#allocation12]
        $region44: #{tpu_custom_call.1} parent=11 // pred_fallthru
          _
        // Predicated region
        $region45: #{tpu_custom_call.1} parent=11 // pred_check
          %p419 = pneg %p241
        $region46: #{tpu_custom_call.1} parent=11 // pred_check_branch
          %421 = sbr.rel (%p419) target = $region48
        $region47: #{tpu_custom_call.1} parent=11 // pred_region
          _
        $region48: #{tpu_custom_call.1} parent=11 // pred_fallthru
          _
        // Predicated region
        $region49: #{tpu_custom_call.1} parent=11 // pred_check
          %p422 = pneg %p262
        $region50: #{tpu_custom_call.1} parent=11 // pred_check_branch
          %424 = sbr.rel (%p422) target = $region52
        $region51: #{tpu_custom_call.1} parent=11 // pred_region
          _
        $region52: #{tpu_custom_call.1} parent=11 // pred_fallthru
          _
        // Predicated region
        $region53: #{tpu_custom_call.1} parent=11 // pred_check
          %p425 = pneg %p283
        $region54: #{tpu_custom_call.1} parent=11 // pred_check_branch
          %427 = sbr.rel (%p425) target = $region56
        $region55: #{tpu_custom_call.1} parent=11 // pred_region
          _
        $region56: #{tpu_custom_call.1} parent=11 // pred_fallthru
          _
        // Predicated region
        $region57: #{tpu_custom_call.1} parent=11 // pred_check
          %p428 = pneg %p304
        $region58: #{tpu_custom_call.1} parent=11 // pred_check_branch
          %430 = sbr.rel (%p428) target = $region60
        $region59: #{tpu_custom_call.1} parent=11 // pred_region
          _
        $region60: #{tpu_custom_call.1} parent=11 // pred_fallthru
          _
      $region12: #{tpu_custom_call.1} parent=5 // pred_fallthru
        _
      %p431 = scmp.lt.s32.totalorder %s26, 2
      // Predicated region
      $region61: #{tpu_custom_call.1} parent=5 // pred_check
        %p432 = pneg %p431
      $region62: #{tpu_custom_call.1} parent=5 // pred_check_branch
        %434 = sbr.rel (%p432) target = $region64
      $region63: #{tpu_custom_call.1} parent=5 // pred_region
        // Predicated region
        $region65: #{tpu_custom_call.1} parent=63 // pred_check
          %p435 = pneg %p46
        $region66: #{tpu_custom_call.1} parent=63 // pred_check_branch
          %437 = sbr.rel (%p435) target = $region68
        $region67: #{tpu_custom_call.1} parent=63 // pred_region
          %p438 = scmp.lt.s32.totalorder %s26, 1
          %s439 = scalar_select %p438, %s26, 1
          %s440 = smul.addr %s439, 8
          %s441 = scalar_lea.vmem %s0, %s440
        $region68: #{tpu_custom_call.1} parent=63 // pred_fallthru
          _
      $region64: #{tpu_custom_call.1} parent=5 // pred_fallthru
        _
      %p442 = scmp.le.s32.totalorder 1, %s26
      %p443 = scmp.lt.s32.totalorder %s26, 3
      %p444 = pnand %p442, %p443
      %p445 = pneg %p444
      // Predicated region
      $region69: #{tpu_custom_call.1} parent=5 // pred_check
        _
      $region70: #{tpu_custom_call.1} parent=5 // pred_check_branch
        %447 = sbr.rel (%p444) target = $region72
      $region71: #{tpu_custom_call.1} parent=5 // pred_region
        %s448 = ssub.s32 %s26, 1
        // Predicated region
        $region73: #{tpu_custom_call.1} parent=71 // pred_check
          %p449 = pneg %p94
        $region74: #{tpu_custom_call.1} parent=71 // pred_check_branch
          %451 = sbr.rel (%p449) target = $region76
        $region75: #{tpu_custom_call.1} parent=71 // pred_region
          %452 = dma.done [#allocation3], 16
        $region76: #{tpu_custom_call.1} parent=71 // pred_fallthru
          _
        // Predicated region
        $region77: #{tpu_custom_call.1} parent=71 // pred_check
          %p453 = pneg %p136
        $region78: #{tpu_custom_call.1} parent=71 // pred_check_branch
          %455 = sbr.rel (%p453) target = $region80
        $region79: #{tpu_custom_call.1} parent=71 // pred_region
          %456 = dma.done [#allocation6], 16
        $region80: #{tpu_custom_call.1} parent=71 // pred_fallthru
          _
        // Predicated region
        $region81: #{tpu_custom_call.1} parent=71 // pred_check
          %p457 = pneg %p157
        $region82: #{tpu_custom_call.1} parent=71 // pred_check_branch
          %459 = sbr.rel (%p457) target = $region84
        $region83: #{tpu_custom_call.1} parent=71 // pred_region
          %460 = dma.done [#allocation6], 16
        $region84: #{tpu_custom_call.1} parent=71 // pred_fallthru
          _
        // Predicated region
        $region85: #{tpu_custom_call.1} parent=71 // pred_check
          %p461 = pneg %p178
        $region86: #{tpu_custom_call.1} parent=71 // pred_check_branch
          %463 = sbr.rel (%p461) target = $region88
        $region87: #{tpu_custom_call.1} parent=71 // pred_region
          %464 = dma.done [#allocation9], 16
        $region88: #{tpu_custom_call.1} parent=71 // pred_fallthru
          _
        // Predicated region
        $region89: #{tpu_custom_call.1} parent=71 // pred_check
          %p465 = pneg %p199
        $region90: #{tpu_custom_call.1} parent=71 // pred_check_branch
          %467 = sbr.rel (%p465) target = $region92
        $region91: #{tpu_custom_call.1} parent=71 // pred_region
          %468 = dma.done [#allocation9], 256
        $region92: #{tpu_custom_call.1} parent=71 // pred_fallthru
          _
        // Predicated region
        $region93: #{tpu_custom_call.1} parent=71 // pred_check
          %p469 = pneg %p220
        $region94: #{tpu_custom_call.1} parent=71 // pred_check_branch
          %471 = sbr.rel (%p469) target = $region96
        $region95: #{tpu_custom_call.1} parent=71 // pred_region
          %472 = dma.done [#allocation12], 16
        $region96: #{tpu_custom_call.1} parent=71 // pred_fallthru
          _
        %p473 = scmp.lt.s32.totalorder %s31, 1
        %s474 = scalar_select %p473, %s31, 1
        %s475 = smul.addr %s474, 8
        %s476 = scalar_lea.vmem %s0, %s475
        %p477 = pneg %p52
        %p478 = pneg %p49
        %p479 = pneg %p73
        %p480 = pneg %p70
        %p481 = pneg %p94
        %p482 = pneg %p91
        %p483 = pneg %p115
        %p484 = pneg %p112
        %p485 = pneg %p136
        %p486 = pneg %p133
        %p487 = pneg %p157
        %p488 = pneg %p154
        %p489 = pneg %p178
        %p490 = pneg %p175
        %p491 = pneg %p199
        %p492 = pneg %p196
        %p493 = pneg %p220
        %p494 = pneg %p217
        %p495 = pneg %p241
        %p496 = pneg %p238
        %p497 = pneg %p262
        %p498 = pneg %p259
        %p499 = pneg %p283
        %p500 = pneg %p280
        %p501 = pneg %p304
        %p502 = pneg %p301
        %p503 = pneg %p330
        %p504 = pneg %p327
        %s505 = sand.u32 %s317, 1
        %s506 = scalar_lea.sflag [#allocation4], %s505
        %s507 = sand.u32 %s317, 1
        %s508 = smul.addr %s507, 8
        %s509 = scalar_lea.vmem [#allocation13], %s508
        %p510 = scmp.lt.s32.totalorder %s31, 1
        %s511 = scalar_select %p510, %s31, 1
        %s512 = smul.addr %s511, 8
        %s513 = scalar_lea.vmem %s0, %s512
        %v515 = vld [vmem:[%s513] sm:$0xff]
        loop: start=0, step=1, limit=3
        $region97: #{tpu_custom_call.1} parent=71 // loop_pre_header
          _
        $region98: #{tpu_custom_call.1} parent=71 // loop_header
          %s517 = sphi 0, %s521
          %p518 = scmp.ge.s32.totalorder %s517, 3
          %v522 = vphi %v515, %v1329
        $region99: #{tpu_custom_call.1} parent=71 // loop_header_branch
          %520 = sbr.rel (%p518) target = $region103
        $region100: #{tpu_custom_call.1} parent=71 // loop_body
          %v523 = vpack.c.bf16 %v522, %v522
          %v524 = vld [vmem:[%s1] sm:$0xf]
          %v525 = vld [vmem:[%s1 + $0x4] sm:$0xf]
          %v526 = vld [vmem:[%s1 + $0x8] sm:$0xf]
          %v527 = vld [vmem:[%s1 + $0xc] sm:$0xf]
          %v528 = vld [vmem:[#allocation2] sm:$0x1]
          %v530 = vlaneseq
          %v531 = vshrl.u32 %v530, 7
          %v532 = vsub.s32 0, %v531
          %v533 = vrot.slane %v528, %v532
          %v539 = vunpack.c.l.b16 %v524
          %v540 = vunpack.c.l.b16 %v525
          %v541 = vunpack.c.l.b16 %v526
          %v542 = vunpack.c.l.b16 %v527
          %v543 = vpack.c.b16 %v540, %v539
          %v544 = vpack.c.b16 %v542, %v541
          %vm547 = vcmask 261120
          %v549 = vsel %vm547, %v523, 0
          %551 = vmatprep.subr.bf16.mxu0 0
          %552 = vmatpush1.bf16.msra.mxu0 0
          %553 = vmatprep.subr.bf16.mxu0 0
          %554 = vmatpush1.bf16.msra.mxu0 0
          %555 = vmatprep.subr.bf16.mxu0 0
          %556 = vmatpush1.bf16.msra.mxu0 0
          %557 = vmatprep.subr.bf16.mxu0 0
          %558 = vmatpush1.bf16.msra.mxu0 0
          %559 = vmatprep.subr.bf16.mxu0 0
          %560 = vmatpush1.bf16.msra.mxu0 0
          %561 = vmatprep.subr.bf16.mxu0 0
          %562 = vmatpush1.bf16.msra.mxu0 0
          %563 = vmatprep.subr.bf16.mxu0 0
          %564 = vmatpush1.bf16.msra.mxu0 %v544
          %565 = vmatprep.subr.bf16.mxu0 0
          %566 = vmatpush1.bf16.msra.mxu0 %v543
          %567 = vmatprep.subr.bf16.mxu0 0
          %568 = vmatpush2.bf16.msra.mxu0 0
          %569 = vmatprep.subr.bf16.mxu0 0
          %570 = vmatpush2.bf16.msra.mxu0 0
          %571 = vmatprep.subr.bf16.mxu0 0
          %572 = vmatpush2.bf16.msra.mxu0 0
          %573 = vmatprep.subr.bf16.mxu0 0
          %574 = vmatpush2.bf16.msra.mxu0 0
          %575 = vmatprep.subr.bf16.mxu0 0
          %576 = vmatpush2.bf16.msra.mxu0 0
          %577 = vmatprep.subr.bf16.mxu0 0
          %578 = vmatpush2.bf16.msra.mxu0 0
          %579 = vmatprep.subr.bf16.mxu0 0
          %580 = vmatpush2.bf16.msra.mxu0 0
          %581 = vmatprep.subr.bf16.mxu0 0
          %582 = vmatpush2.bf16.msra.mxu0 0
          %583 = vmatprep.mubr.bf16.mxu0 0
          %584 = vmatmul.mubr.bf16.gmra.mxu0 %v549
          %v585 = vpop.f32.mrf.mxu0
          %v586 = vadd.f32 %v533, %v585
          %v587 = vpop.f32.mrf.mxu0
          %v588 = vpop.f32.mrf.mxu0
          %v589 = vpop.f32.mrf.mxu0
          %590 = vdwg.mxu0
          %v591 = vpack.c.bf16 %v586, %v586
          %593 = vrot.lane.b32.xlu0 %v591, 96
          %v594 = vpop.permute.xlu0 %593
          %vm595 = vcmask 64512
          %v597 = vsel %vm595, %v591, 0
          %v600 = vsel %vm595, %v594, 0
          %602 = vmatprep.subr.bf16.mxu0 0
          %603 = vmatpush1.bf16.xpose.msra.mxu0 0
          %604 = vmatprep.subr.bf16.mxu0 0
          %605 = vmatpush1.bf16.xpose.msra.mxu0 0
          %606 = vmatprep.subr.bf16.mxu0 0
          %607 = vmatpush1.bf16.xpose.msra.mxu0 0
          %608 = vmatprep.subr.bf16.mxu0 0
          %609 = vmatpush1.bf16.xpose.msra.mxu0 0
          %610 = vmatprep.subr.bf16.mxu0 0
          %611 = vmatpush1.bf16.xpose.msra.mxu0 0
          %612 = vmatprep.subr.bf16.mxu0 0
          %613 = vmatpush1.bf16.xpose.msra.mxu0 0
          %614 = vmatprep.subr.bf16.mxu0 0
          %615 = vmatpush1.bf16.xpose.msra.mxu0 0
          %616 = vmatprep.subr.bf16.mxu0 0
          %617 = vmatpush1.bf16.xpose.msra.mxu0 %v600
          %618 = vmatprep.subr.bf16.mxu0 0
          %619 = vmatpush2.bf16.xpose.msra.mxu0 0
          %620 = vmatprep.subr.bf16.mxu0 0
          %621 = vmatpush2.bf16.xpose.msra.mxu0 0
          %622 = vmatprep.subr.bf16.mxu0 0
          %623 = vmatpush2.bf16.xpose.msra.mxu0 0
          %624 = vmatprep.subr.bf16.mxu0 0
          %625 = vmatpush2.bf16.xpose.msra.mxu0 0
          %626 = vmatprep.subr.bf16.mxu0 0
          %627 = vmatpush2.bf16.xpose.msra.mxu0 0
          %628 = vmatprep.subr.bf16.mxu0 0
          %629 = vmatpush2.bf16.xpose.msra.mxu0 0
          %630 = vmatprep.subr.bf16.mxu0 0
          %631 = vmatpush2.bf16.xpose.msra.mxu0 0
          %632 = vmatprep.subr.bf16.mxu0 0
          %633 = vmatpush2.bf16.xpose.msra.mxu0 0
          %634 = vmatprep.mubr.bf16.mxu0 0
          %635 = vmatmul.mubr.bf16.gmra.mxu0 %v597
          %v636 = vpop.f32.mrf.mxu0
          %v637 = vadd.f32 0.0, %v636
          %v638 = vpop.f32.mrf.mxu0
          %v639 = vpop.f32.mrf.mxu0
          %v640 = vpop.f32.mrf.mxu0
          %641 = vdwg.mxu0
          %v642 = vsel %vm595, %v637, -inf
          %643 = vmax.xlane.f32.xlu0 %v642
          %v644 = vpop.xlane.xlu0 %643
          %v645 = vsub.f32 %v637, %v644
          %v646 = vmul.f32 %v645, 1.442695
          %v647 = vpow.pop %v646
          %v648 = vsel %vm595, %v647, 0.0
          %649 = vadd.xlane.f32.xlu0 %v648
          %v650 = vpop.xlane.xlu0 %649
          %v651 = vrcp.pop %v650
          %v652 = vmul.f32 %v647, %v651
          %v653 = vpack.c.bf16 %v652, %v652
          %654 = vrot.lane.b32.xlu0 %v591, 64
          %v655 = vpop.permute.xlu0 %654
          %v657 = vsel %vm595, %v653, 0
          %vm659 = vcmask 1043456
          %v661 = vsel %vm659, %v655, 0
          %663 = vmatprep.subr.bf16.mxu0 0
          %664 = vmatpush1.bf16.msra.mxu0 0
          %665 = vmatprep.subr.bf16.mxu0 0
          %666 = vmatpush1.bf16.msra.mxu0 0
          %667 = vmatprep.subr.bf16.mxu0 0
          %668 = vmatpush1.bf16.msra.mxu0 0
          %669 = vmatprep.subr.bf16.mxu0 0
          %670 = vmatpush1.bf16.msra.mxu0 0
          %671 = vmatprep.subr.bf16.mxu0 0
          %672 = vmatpush1.bf16.msra.mxu0 0
          %673 = vmatprep.subr.bf16.mxu0 0
          %674 = vmatpush1.bf16.msra.mxu0 0
          %675 = vmatprep.subr.bf16.mxu0 0
          %676 = vmatpush1.bf16.msra.mxu0 0
          %677 = vmatprep.subr.bf16.mxu0 0
          %678 = vmatpush1.bf16.msra.mxu0 %v661
          %679 = vmatprep.subr.bf16.mxu0 0
          %680 = vmatpush2.bf16.msra.mxu0 0
          %681 = vmatprep.subr.bf16.mxu0 0
          %682 = vmatpush2.bf16.msra.mxu0 0
          %683 = vmatprep.subr.bf16.mxu0 0
          %684 = vmatpush2.bf16.msra.mxu0 0
          %685 = vmatprep.subr.bf16.mxu0 0
          %686 = vmatpush2.bf16.msra.mxu0 0
          %687 = vmatprep.subr.bf16.mxu0 0
          %688 = vmatpush2.bf16.msra.mxu0 0
          %689 = vmatprep.subr.bf16.mxu0 0
          %690 = vmatpush2.bf16.msra.mxu0 0
          %691 = vmatprep.subr.bf16.mxu0 0
          %692 = vmatpush2.bf16.msra.mxu0 0
          %693 = vmatprep.subr.bf16.mxu0 0
          %694 = vmatpush2.bf16.msra.mxu0 0
          %695 = vmatprep.mubr.bf16.mxu0 0
          %696 = vmatmul.mubr.bf16.gmra.mxu0 %v657
          %v697 = vpop.f32.mrf.mxu0
          %v698 = vadd.f32 0.0, %v697
          %v699 = vpop.f32.mrf.mxu0
          %v700 = vpop.f32.mrf.mxu0
          %v701 = vpop.f32.mrf.mxu0
          %702 = vdwg.mxu0
          %703 = vrot.lane.b32.xlu0 %v591, 120
          %v704 = vpop.permute.xlu0 %703
          %705 = vrot.lane.b32.xlu0 %v591, 88
          %v706 = vpop.permute.xlu0 %705
          %v708 = vsel %vm595, %v704, 0
          %v711 = vsel %vm595, %v706, 0
          %713 = vmatprep.subr.bf16.mxu0 0
          %714 = vmatpush1.bf16.xpose.msra.mxu0 0
          %715 = vmatprep.subr.bf16.mxu0 0
          %716 = vmatpush1.bf16.xpose.msra.mxu0 0
          %717 = vmatprep.subr.bf16.mxu0 0
          %718 = vmatpush1.bf16.xpose.msra.mxu0 0
          %719 = vmatprep.subr.bf16.mxu0 0
          %720 = vmatpush1.bf16.xpose.msra.mxu0 0
          %721 = vmatprep.subr.bf16.mxu0 0
          %722 = vmatpush1.bf16.xpose.msra.mxu0 0
          %723 = vmatprep.subr.bf16.mxu0 0
          %724 = vmatpush1.bf16.xpose.msra.mxu0 0
          %725 = vmatprep.subr.bf16.mxu0 0
          %726 = vmatpush1.bf16.xpose.msra.mxu0 0
          %727 = vmatprep.subr.bf16.mxu0 0
          %728 = vmatpush1.bf16.xpose.msra.mxu0 %v711
          %729 = vmatprep.subr.bf16.mxu0 0
          %730 = vmatpush2.bf16.xpose.msra.mxu0 0
          %731 = vmatprep.subr.bf16.mxu0 0
          %732 = vmatpush2.bf16.xpose.msra.mxu0 0
          %733 = vmatprep.subr.bf16.mxu0 0
          %734 = vmatpush2.bf16.xpose.msra.mxu0 0
          %735 = vmatprep.subr.bf16.mxu0 0
          %736 = vmatpush2.bf16.xpose.msra.mxu0 0
          %737 = vmatprep.subr.bf16.mxu0 0
          %738 = vmatpush2.bf16.xpose.msra.mxu0 0
          %739 = vmatprep.subr.bf16.mxu0 0
          %740 = vmatpush2.bf16.xpose.msra.mxu0 0
          %741 = vmatprep.subr.bf16.mxu0 0
          %742 = vmatpush2.bf16.xpose.msra.mxu0 0
          %743 = vmatprep.subr.bf16.mxu0 0
          %744 = vmatpush2.bf16.xpose.msra.mxu0 0
          %745 = vmatprep.mubr.bf16.mxu0 0
          %746 = vmatmul.mubr.bf16.gmra.mxu0 %v708
          %v747 = vpop.f32.mrf.mxu0
          %v748 = vadd.f32 0.0, %v747
          %v749 = vpop.f32.mrf.mxu0
          %v750 = vpop.f32.mrf.mxu0
          %v751 = vpop.f32.mrf.mxu0
          %752 = vdwg.mxu0
          %v753 = vsel %vm595, %v748, -inf
          %754 = vmax.xlane.f32.xlu0 %v753
          %v755 = vpop.xlane.xlu0 %754
          %v756 = vsub.f32 %v748, %v755
          %v757 = vmul.f32 %v756, 1.442695
          %v758 = vpow.pop %v757
          %v759 = vsel %vm595, %v758, 0.0
          %760 = vadd.xlane.f32.xlu0 %v759
          %v761 = vpop.xlane.xlu0 %760
          %v762 = vrcp.pop %v761
          %v763 = vmul.f32 %v758, %v762
          %v764 = vpack.c.bf16 %v763, %v763
          %765 = vrot.lane.b32.xlu0 %v591, 56
          %v766 = vpop.permute.xlu0 %765
          %v768 = vsel %vm595, %v764, 0
          %v771 = vsel %vm659, %v766, 0
          %773 = vmatprep.subr.bf16.mxu0 0
          %774 = vmatpush1.bf16.msra.mxu0 0
          %775 = vmatprep.subr.bf16.mxu0 0
          %776 = vmatpush1.bf16.msra.mxu0 0
          %777 = vmatprep.subr.bf16.mxu0 0
          %778 = vmatpush1.bf16.msra.mxu0 0
          %779 = vmatprep.subr.bf16.mxu0 0
          %780 = vmatpush1.bf16.msra.mxu0 0
          %781 = vmatprep.subr.bf16.mxu0 0
          %782 = vmatpush1.bf16.msra.mxu0 0
          %783 = vmatprep.subr.bf16.mxu0 0
          %784 = vmatpush1.bf16.msra.mxu0 0
          %785 = vmatprep.subr.bf16.mxu0 0
          %786 = vmatpush1.bf16.msra.mxu0 0
          %787 = vmatprep.subr.bf16.mxu0 0
          %788 = vmatpush1.bf16.msra.mxu0 %v771
          %789 = vmatprep.subr.bf16.mxu0 0
          %790 = vmatpush2.bf16.msra.mxu0 0
          %791 = vmatprep.subr.bf16.mxu0 0
          %792 = vmatpush2.bf16.msra.mxu0 0
          %793 = vmatprep.subr.bf16.mxu0 0
          %794 = vmatpush2.bf16.msra.mxu0 0
          %795 = vmatprep.subr.bf16.mxu0 0
          %796 = vmatpush2.bf16.msra.mxu0 0
          %797 = vmatprep.subr.bf16.mxu0 0
          %798 = vmatpush2.bf16.msra.mxu0 0
          %799 = vmatprep.subr.bf16.mxu0 0
          %800 = vmatpush2.bf16.msra.mxu0 0
          %801 = vmatprep.subr.bf16.mxu0 0
          %802 = vmatpush2.bf16.msra.mxu0 0
          %803 = vmatprep.subr.bf16.mxu0 0
          %804 = vmatpush2.bf16.msra.mxu0 0
          %805 = vmatprep.mubr.bf16.mxu0 0
          %806 = vmatmul.mubr.bf16.gmra.mxu0 %v768
          %v807 = vpop.f32.mrf.mxu0
          %v808 = vadd.f32 0.0, %v807
          %v809 = vpop.f32.mrf.mxu0
          %v810 = vpop.f32.mrf.mxu0
          %v811 = vpop.f32.mrf.mxu0
          %812 = vdwg.mxu0
          %813 = vrot.lane.b32.xlu0 %v591, 112
          %v814 = vpop.permute.xlu0 %813
          %815 = vrot.lane.b32.xlu0 %v591, 80
          %v816 = vpop.permute.xlu0 %815
          %v818 = vsel %vm595, %v814, 0
          %v821 = vsel %vm595, %v816, 0
          %823 = vmatprep.subr.bf16.mxu0 0
          %824 = vmatpush1.bf16.xpose.msra.mxu0 0
          %825 = vmatprep.subr.bf16.mxu0 0
          %826 = vmatpush1.bf16.xpose.msra.mxu0 0
          %827 = vmatprep.subr.bf16.mxu0 0
          %828 = vmatpush1.bf16.xpose.msra.mxu0 0
          %829 = vmatprep.subr.bf16.mxu0 0
          %830 = vmatpush1.bf16.xpose.msra.mxu0 0
          %831 = vmatprep.subr.bf16.mxu0 0
          %832 = vmatpush1.bf16.xpose.msra.mxu0 0
          %833 = vmatprep.subr.bf16.mxu0 0
          %834 = vmatpush1.bf16.xpose.msra.mxu0 0
          %835 = vmatprep.subr.bf16.mxu0 0
          %836 = vmatpush1.bf16.xpose.msra.mxu0 0
          %837 = vmatprep.subr.bf16.mxu0 0
          %838 = vmatpush1.bf16.xpose.msra.mxu0 %v821
          %839 = vmatprep.subr.bf16.mxu0 0
          %840 = vmatpush2.bf16.xpose.msra.mxu0 0
          %841 = vmatprep.subr.bf16.mxu0 0
          %842 = vmatpush2.bf16.xpose.msra.mxu0 0
          %843 = vmatprep.subr.bf16.mxu0 0
          %844 = vmatpush2.bf16.xpose.msra.mxu0 0
          %845 = vmatprep.subr.bf16.mxu0 0
          %846 = vmatpush2.bf16.xpose.msra.mxu0 0
          %847 = vmatprep.subr.bf16.mxu0 0
          %848 = vmatpush2.bf16.xpose.msra.mxu0 0
          %849 = vmatprep.subr.bf16.mxu0 0
          %850 = vmatpush2.bf16.xpose.msra.mxu0 0
          %851 = vmatprep.subr.bf16.mxu0 0
          %852 = vmatpush2.bf16.xpose.msra.mxu0 0
          %853 = vmatprep.subr.bf16.mxu0 0
          %854 = vmatpush2.bf16.xpose.msra.mxu0 0
          %855 = vmatprep.mubr.bf16.mxu0 0
          %856 = vmatmul.mubr.bf16.gmra.mxu0 %v818
          %v857 = vpop.f32.mrf.mxu0
          %v858 = vadd.f32 0.0, %v857
          %v859 = vpop.f32.mrf.mxu0
          %v860 = vpop.f32.mrf.mxu0
          %v861 = vpop.f32.mrf.mxu0
          %862 = vdwg.mxu0
          %v863 = vsel %vm595, %v858, -inf
          %864 = vmax.xlane.f32.xlu0 %v863
          %v865 = vpop.xlane.xlu0 %864
          %v866 = vsub.f32 %v858, %v865
          %v867 = vmul.f32 %v866, 1.442695
          %v868 = vpow.pop %v867
          %v869 = vsel %vm595, %v868, 0.0
          %870 = vadd.xlane.f32.xlu0 %v869
          %v871 = vpop.xlane.xlu0 %870
          %v872 = vrcp.pop %v871
          %v873 = vmul.f32 %v868, %v872
          %v874 = vpack.c.bf16 %v873, %v873
          %875 = vrot.lane.b32.xlu0 %v591, 48
          %v876 = vpop.permute.xlu0 %875
          %v878 = vsel %vm595, %v874, 0
          %v881 = vsel %vm659, %v876, 0
          %883 = vmatprep.subr.bf16.mxu0 0
          %884 = vmatpush1.bf16.msra.mxu0 0
          %885 = vmatprep.subr.bf16.mxu0 0
          %886 = vmatpush1.bf16.msra.mxu0 0
          %887 = vmatprep.subr.bf16.mxu0 0
          %888 = vmatpush1.bf16.msra.mxu0 0
          %889 = vmatprep.subr.bf16.mxu0 0
          %890 = vmatpush1.bf16.msra.mxu0 0
          %891 = vmatprep.subr.bf16.mxu0 0
          %892 = vmatpush1.bf16.msra.mxu0 0
          %893 = vmatprep.subr.bf16.mxu0 0
          %894 = vmatpush1.bf16.msra.mxu0 0
          %895 = vmatprep.subr.bf16.mxu0 0
          %896 = vmatpush1.bf16.msra.mxu0 0
          %897 = vmatprep.subr.bf16.mxu0 0
          %898 = vmatpush1.bf16.msra.mxu0 %v881
          %899 = vmatprep.subr.bf16.mxu0 0
          %900 = vmatpush2.bf16.msra.mxu0 0
          %901 = vmatprep.subr.bf16.mxu0 0
          %902 = vmatpush2.bf16.msra.mxu0 0
          %903 = vmatprep.subr.bf16.mxu0 0
          %904 = vmatpush2.bf16.msra.mxu0 0
          %905 = vmatprep.subr.bf16.mxu0 0
          %906 = vmatpush2.bf16.msra.mxu0 0
          %907 = vmatprep.subr.bf16.mxu0 0
          %908 = vmatpush2.bf16.msra.mxu0 0
          %909 = vmatprep.subr.bf16.mxu0 0
          %910 = vmatpush2.bf16.msra.mxu0 0
          %911 = vmatprep.subr.bf16.mxu0 0
          %912 = vmatpush2.bf16.msra.mxu0 0
          %913 = vmatprep.subr.bf16.mxu0 0
          %914 = vmatpush2.bf16.msra.mxu0 0
          %915 = vmatprep.mubr.bf16.mxu0 0
          %916 = vmatmul.mubr.bf16.gmra.mxu0 %v878
          %v917 = vpop.f32.mrf.mxu0
          %v918 = vadd.f32 0.0, %v917
          %v919 = vpop.f32.mrf.mxu0
          %v920 = vpop.f32.mrf.mxu0
          %v921 = vpop.f32.mrf.mxu0
          %922 = vdwg.mxu0
          %923 = vrot.lane.b32.xlu0 %v591, 104
          %v924 = vpop.permute.xlu0 %923
          %925 = vrot.lane.b32.xlu0 %v591, 72
          %v926 = vpop.permute.xlu0 %925
          %v928 = vsel %vm595, %v924, 0
          %v931 = vsel %vm595, %v926, 0
          %933 = vmatprep.subr.bf16.mxu0 0
          %934 = vmatpush1.bf16.xpose.msra.mxu0 0
          %935 = vmatprep.subr.bf16.mxu0 0
          %936 = vmatpush1.bf16.xpose.msra.mxu0 0
          %937 = vmatprep.subr.bf16.mxu0 0
          %938 = vmatpush1.bf16.xpose.msra.mxu0 0
          %939 = vmatprep.subr.bf16.mxu0 0
          %940 = vmatpush1.bf16.xpose.msra.mxu0 0
          %941 = vmatprep.subr.bf16.mxu0 0
          %942 = vmatpush1.bf16.xpose.msra.mxu0 0
          %943 = vmatprep.subr.bf16.mxu0 0
          %944 = vmatpush1.bf16.xpose.msra.mxu0 0
          %945 = vmatprep.subr.bf16.mxu0 0
          %946 = vmatpush1.bf16.xpose.msra.mxu0 0
          %947 = vmatprep.subr.bf16.mxu0 0
          %948 = vmatpush1.bf16.xpose.msra.mxu0 %v931
          %949 = vmatprep.subr.bf16.mxu0 0
          %950 = vmatpush2.bf16.xpose.msra.mxu0 0
          %951 = vmatprep.subr.bf16.mxu0 0
          %952 = vmatpush2.bf16.xpose.msra.mxu0 0
          %953 = vmatprep.subr.bf16.mxu0 0
          %954 = vmatpush2.bf16.xpose.msra.mxu0 0
          %955 = vmatprep.subr.bf16.mxu0 0
          %956 = vmatpush2.bf16.xpose.msra.mxu0 0
          %957 = vmatprep.subr.bf16.mxu0 0
          %958 = vmatpush2.bf16.xpose.msra.mxu0 0
          %959 = vmatprep.subr.bf16.mxu0 0
          %960 = vmatpush2.bf16.xpose.msra.mxu0 0
          %961 = vmatprep.subr.bf16.mxu0 0
          %962 = vmatpush2.bf16.xpose.msra.mxu0 0
          %963 = vmatprep.subr.bf16.mxu0 0
          %964 = vmatpush2.bf16.xpose.msra.mxu0 0
          %965 = vmatprep.mubr.bf16.mxu0 0
          %966 = vmatmul.mubr.bf16.gmra.mxu0 %v928
          %v967 = vpop.f32.mrf.mxu0
          %v968 = vadd.f32 0.0, %v967
          %v969 = vpop.f32.mrf.mxu0
          %v970 = vpop.f32.mrf.mxu0
          %v971 = vpop.f32.mrf.mxu0
          %972 = vdwg.mxu0
          %v973 = vsel %vm595, %v968, -inf
          %974 = vmax.xlane.f32.xlu0 %v973
          %v975 = vpop.xlane.xlu0 %974
          %v976 = vsub.f32 %v968, %v975
          %v977 = vmul.f32 %v976, 1.442695
          %v978 = vpow.pop %v977
          %v979 = vsel %vm595, %v978, 0.0
          %980 = vadd.xlane.f32.xlu0 %v979
          %v981 = vpop.xlane.xlu0 %980
          %v982 = vrcp.pop %v981
          %v983 = vmul.f32 %v978, %v982
          %v984 = vpack.c.bf16 %v983, %v983
          %985 = vrot.lane.b32.xlu0 %v591, 40
          %v986 = vpop.permute.xlu0 %985
          %v988 = vsel %vm595, %v984, 0
          %v991 = vsel %vm659, %v986, 0
          %993 = vmatprep.subr.bf16.mxu0 0
          %994 = vmatpush1.bf16.msra.mxu0 0
          %995 = vmatprep.subr.bf16.mxu0 0
          %996 = vmatpush1.bf16.msra.mxu0 0
          %997 = vmatprep.subr.bf16.mxu0 0
          %998 = vmatpush1.bf16.msra.mxu0 0
          %999 = vmatprep.subr.bf16.mxu0 0
          %1000 = vmatpush1.bf16.msra.mxu0 0
          %1001 = vmatprep.subr.bf16.mxu0 0
          %1002 = vmatpush1.bf16.msra.mxu0 0
          %1003 = vmatprep.subr.bf16.mxu0 0
          %1004 = vmatpush1.bf16.msra.mxu0 0
          %1005 = vmatprep.subr.bf16.mxu0 0
          %1006 = vmatpush1.bf16.msra.mxu0 0
          %1007 = vmatprep.subr.bf16.mxu0 0
          %1008 = vmatpush1.bf16.msra.mxu0 %v991
          %1009 = vmatprep.subr.bf16.mxu0 0
          %1010 = vmatpush2.bf16.msra.mxu0 0
          %1011 = vmatprep.subr.bf16.mxu0 0
          %1012 = vmatpush2.bf16.msra.mxu0 0
          %1013 = vmatprep.subr.bf16.mxu0 0
          %1014 = vmatpush2.bf16.msra.mxu0 0
          %1015 = vmatprep.subr.bf16.mxu0 0
          %1016 = vmatpush2.bf16.msra.mxu0 0
          %1017 = vmatprep.subr.bf16.mxu0 0
          %1018 = vmatpush2.bf16.msra.mxu0 0
          %1019 = vmatprep.subr.bf16.mxu0 0
          %1020 = vmatpush2.bf16.msra.mxu0 0
          %1021 = vmatprep.subr.bf16.mxu0 0
          %1022 = vmatpush2.bf16.msra.mxu0 0
          %1023 = vmatprep.subr.bf16.mxu0 0
          %1024 = vmatpush2.bf16.msra.mxu0 0
          %1025 = vmatprep.mubr.bf16.mxu0 0
          %1026 = vmatmul.mubr.bf16.gmra.mxu0 %v988
          %v1027 = vpop.f32.mrf.mxu0
          %v1028 = vadd.f32 0.0, %v1027
          %v1029 = vpop.f32.mrf.mxu0
          %v1030 = vpop.f32.mrf.mxu0
          %v1031 = vpop.f32.mrf.mxu0
          %1032 = vdwg.mxu0
          %1034 = vrot.lane.b32.xlu0 %v808, 8
          %v1035 = vpop.permute.xlu0 %1034
          %1038 = vrot.lane.b32.xlu0 %v918, 16
          %v1039 = vpop.permute.xlu0 %1038
          %1042 = vrot.lane.b32.xlu0 %v1028, 24
          %v1043 = vpop.permute.xlu0 %1042
          %v1045 = vsel %vm595, %v698, %v1035
          %vm1046 = vcmask 130048
          %v1047 = vsel %vm1046, %v1045, %v1039
          %vm1048 = vcmask 195584
          %v1049 = vsel %vm1048, %v1047, %v1043
          %v1050 = vpack.c.bf16 %v1049, %v1049
          %v1051 = vld [vmem:[%s3] sm:$0xf]
          %v1052 = vld [vmem:[%s3 + $0x4] sm:$0xf]
          %v1053 = vld [vmem:[%s3 + $0x8] sm:$0xf]
          %v1054 = vld [vmem:[%s3 + $0xc] sm:$0xf]
          %v1055 = vld [vmem:[#allocation5] sm:$0x1]
          %v1057 = vlaneseq
          %v1058 = vshrl.u32 %v1057, 7
          %v1059 = vsub.s32 0, %v1058
          %v1060 = vrot.slane %v1055, %v1059
          %v1066 = vunpack.c.l.b16 %v1051
          %v1067 = vunpack.c.l.b16 %v1052
          %v1068 = vunpack.c.l.b16 %v1053
          %v1069 = vunpack.c.l.b16 %v1054
          %v1070 = vpack.c.b16 %v1067, %v1066
          %v1071 = vpack.c.b16 %v1069, %v1068
          %v1075 = vsel %vm547, %v1050, 0
          %1077 = vmatprep.subr.bf16.mxu0 0
          %1078 = vmatpush1.bf16.msra.mxu0 0
          %1079 = vmatprep.subr.bf16.mxu0 0
          %1080 = vmatpush1.bf16.msra.mxu0 0
          %1081 = vmatprep.subr.bf16.mxu0 0
          %1082 = vmatpush1.bf16.msra.mxu0 0
          %1083 = vmatprep.subr.bf16.mxu0 0
          %1084 = vmatpush1.bf16.msra.mxu0 0
          %1085 = vmatprep.subr.bf16.mxu0 0
          %1086 = vmatpush1.bf16.msra.mxu0 0
          %1087 = vmatprep.subr.bf16.mxu0 0
          %1088 = vmatpush1.bf16.msra.mxu0 0
          %1089 = vmatprep.subr.bf16.mxu0 0
          %1090 = vmatpush1.bf16.msra.mxu0 %v1071
          %1091 = vmatprep.subr.bf16.mxu0 0
          %1092 = vmatpush1.bf16.msra.mxu0 %v1070
          %1093 = vmatprep.subr.bf16.mxu0 0
          %1094 = vmatpush2.bf16.msra.mxu0 0
          %1095 = vmatprep.subr.bf16.mxu0 0
          %1096 = vmatpush2.bf16.msra.mxu0 0
          %1097 = vmatprep.subr.bf16.mxu0 0
          %1098 = vmatpush2.bf16.msra.mxu0 0
          %1099 = vmatprep.subr.bf16.mxu0 0
          %1100 = vmatpush2.bf16.msra.mxu0 0
          %1101 = vmatprep.subr.bf16.mxu0 0
          %1102 = vmatpush2.bf16.msra.mxu0 0
          %1103 = vmatprep.subr.bf16.mxu0 0
          %1104 = vmatpush2.bf16.msra.mxu0 0
          %1105 = vmatprep.subr.bf16.mxu0 0
          %1106 = vmatpush2.bf16.msra.mxu0 0
          %1107 = vmatprep.subr.bf16.mxu0 0
          %1108 = vmatpush2.bf16.msra.mxu0 0
          %1109 = vmatprep.mubr.bf16.mxu0 0
          %1110 = vmatmul.mubr.bf16.gmra.mxu0 %v1075
          %v1111 = vpop.f32.mrf.mxu0
          %v1112 = vadd.f32 %v1060, %v1111
          %v1113 = vpop.f32.mrf.mxu0
          %v1114 = vpop.f32.mrf.mxu0
          %v1115 = vpop.f32.mrf.mxu0
          %1116 = vdwg.mxu0
          %v1117 = vadd.f32 %v522, %v1112
          %v1118 = vld [vmem:[#allocation7] sm:$0x1]
          %v1119 = vld [vmem:[#allocation8] sm:$0x1]
          %v1120 = vsel %vm547, %v1117, 0.0
          %1121 = vadd.xlane.f32.xlu0 %v1120
          %v1122 = vpop.xlane.xlu0 %1121
          %v1123 = vrcp.pop 32.0
          %v1124 = vmul.f32 %v1122, %v1123
          %v1125 = vsub.f32 %v1117, %v1124
          %v1126 = vmul.f32 %v1125, %v1125
          %v1127 = vsel %vm547, %v1126, 0.0
          %1128 = vadd.xlane.f32.xlu0 %v1127
          %v1129 = vpop.xlane.xlu0 %1128
          %v1130 = vmul.f32 %v1129, %v1123
          %v1131 = vadd.f32 %v1130, 1e-05
          %v1132 = vrsqrt.pop %v1131
          %v1133 = vmul.f32 %v1125, %v1132
          %v1135 = vlaneseq
          %v1136 = vshrl.u32 %v1135, 7
          %v1137 = vsub.s32 0, %v1136
          %v1138 = vrot.slane %v1118, %v1137
          %v1140 = vmul.f32 %v1133, %v1138
          %v1142 = vlaneseq
          %v1143 = vshrl.u32 %v1142, 7
          %v1144 = vsub.s32 0, %v1143
          %v1145 = vrot.slane %v1119, %v1144
          %v1147 = vadd.f32 %v1140, %v1145
          %v1148 = vpack.c.bf16 %v1147, %v1147
          %v1149 = vld [vmem:[#allocation10] sm:$0xf]
          %v1150 = vld [vmem:[#allocation10 + $0x4] sm:$0xf]
          %v1151 = vld [vmem:[#allocation10 + $0x8] sm:$0xf]
          %v1152 = vld [vmem:[#allocation10 + $0xc] sm:$0xf]
          %v1153 = vld [vmem:[#allocation11] sm:$0x1]
          %v1155 = vlaneseq
          %v1156 = vshrl.u32 %v1155, 7
          %v1157 = vsub.s32 0, %v1156
          %v1158 = vrot.slane %v1153, %v1157
          %v1164 = vunpack.c.l.b16 %v1149
          %v1165 = vunpack.c.l.b16 %v1150
          %v1166 = vunpack.c.l.b16 %v1151
          %v1167 = vunpack.c.l.b16 %v1152
          %v1168 = vpack.c.b16 %v1165, %v1164
          %v1169 = vpack.c.b16 %v1167, %v1166
          %v1173 = vsel %vm547, %v1148, 0
          %1175 = vmatprep.subr.bf16.mxu0 0
          %1176 = vmatpush1.bf16.msra.mxu0 0
          %1177 = vmatprep.subr.bf16.mxu0 0
          %1178 = vmatpush1.bf16.msra.mxu0 0
          %1179 = vmatprep.subr.bf16.mxu0 0
          %1180 = vmatpush1.bf16.msra.mxu0 0
          %1181 = vmatprep.subr.bf16.mxu0 0
          %1182 = vmatpush1.bf16.msra.mxu0 0
          %1183 = vmatprep.subr.bf16.mxu0 0
          %1184 = vmatpush1.bf16.msra.mxu0 0
          %1185 = vmatprep.subr.bf16.mxu0 0
          %1186 = vmatpush1.bf16.msra.mxu0 0
          %1187 = vmatprep.subr.bf16.mxu0 0
          %1188 = vmatpush1.bf16.msra.mxu0 %v1169
          %1189 = vmatprep.subr.bf16.mxu0 0
          %1190 = vmatpush1.bf16.msra.mxu0 %v1168
          %1191 = vmatprep.subr.bf16.mxu0 0
          %1192 = vmatpush2.bf16.msra.mxu0 0
          %1193 = vmatprep.subr.bf16.mxu0 0
          %1194 = vmatpush2.bf16.msra.mxu0 0
          %1195 = vmatprep.subr.bf16.mxu0 0
          %1196 = vmatpush2.bf16.msra.mxu0 0
          %1197 = vmatprep.subr.bf16.mxu0 0
          %1198 = vmatpush2.bf16.msra.mxu0 0
          %1199 = vmatprep.subr.bf16.mxu0 0
          %1200 = vmatpush2.bf16.msra.mxu0 0
          %1201 = vmatprep.subr.bf16.mxu0 0
          %1202 = vmatpush2.bf16.msra.mxu0 0
          %1203 = vmatprep.subr.bf16.mxu0 0
          %1204 = vmatpush2.bf16.msra.mxu0 0
          %1205 = vmatprep.subr.bf16.mxu0 0
          %1206 = vmatpush2.bf16.msra.mxu0 0
          %1207 = vmatprep.mubr.bf16.mxu0 0
          %1208 = vmatmul.mubr.bf16.gmra.mxu0 %v1173
          %v1209 = vpop.f32.mrf.mxu0
          %v1210 = vadd.f32 %v1158, %v1209
          %v1211 = vpop.f32.mrf.mxu0
          %v1212 = vpop.f32.mrf.mxu0
          %v1213 = vpop.f32.mrf.mxu0
          %1214 = vdwg.mxu0
          %v1215 = vmax.f32 %v1210, 0.0
          %v1216 = vpack.c.bf16 %v1215, %v1215
          %v1217 = vld [vmem:[%s9] sm:$0xf]
          %v1218 = vld [vmem:[%s9 + $0x4] sm:$0xf]
          %v1219 = vld [vmem:[%s9 + $0x8] sm:$0xf]
          %v1220 = vld [vmem:[%s9 + $0xc] sm:$0xf]
          %v1221 = vld [vmem:[%s9 + $0x10] sm:$0xf]
          %v1222 = vld [vmem:[%s9 + $0x14] sm:$0xf]
          %v1223 = vld [vmem:[%s9 + $0x18] sm:$0xf]
          %v1224 = vld [vmem:[%s9 + $0x1c] sm:$0xf]
          %v1225 = vld [vmem:[%s10] sm:$0x1]
          %v1227 = vlaneseq
          %v1228 = vshrl.u32 %v1227, 7
          %v1229 = vsub.s32 0, %v1228
          %v1230 = vrot.slane %v1225, %v1229
          %v1240 = vunpack.c.l.b16 %v1217
          %v1241 = vunpack.c.l.b16 %v1218
          %v1242 = vunpack.c.l.b16 %v1219
          %v1243 = vunpack.c.l.b16 %v1220
          %v1244 = vunpack.c.l.b16 %v1221
          %v1245 = vunpack.c.l.b16 %v1222
          %v1246 = vunpack.c.l.b16 %v1223
          %v1247 = vunpack.c.l.b16 %v1224
          %v1248 = vpack.c.b16 %v1241, %v1240
          %v1249 = vpack.c.b16 %v1243, %v1242
          %v1250 = vpack.c.b16 %v1245, %v1244
          %v1251 = vpack.c.b16 %v1247, %v1246
          %vm1256 = vcmask 523264
          %v1258 = vsel %vm1256, %v1216, 0
          %1260 = vmatprep.subr.bf16.mxu0 0
          %1261 = vmatpush1.bf16.msra.mxu0 0
          %1262 = vmatprep.subr.bf16.mxu0 0
          %1263 = vmatpush1.bf16.msra.mxu0 0
          %1264 = vmatprep.subr.bf16.mxu0 0
          %1265 = vmatpush1.bf16.msra.mxu0 0
          %1266 = vmatprep.subr.bf16.mxu0 0
          %1267 = vmatpush1.bf16.msra.mxu0 0
          %1268 = vmatprep.subr.bf16.mxu0 0
          %1269 = vmatpush1.bf16.msra.mxu0 %v1251
          %1270 = vmatprep.subr.bf16.mxu0 0
          %1271 = vmatpush1.bf16.msra.mxu0 %v1250
          %1272 = vmatprep.subr.bf16.mxu0 0
          %1273 = vmatpush1.bf16.msra.mxu0 %v1249
          %1274 = vmatprep.subr.bf16.mxu0 0
          %1275 = vmatpush1.bf16.msra.mxu0 %v1248
          %1276 = vmatprep.subr.bf16.mxu0 0
          %1277 = vmatpush2.bf16.msra.mxu0 0
          %1278 = vmatprep.subr.bf16.mxu0 0
          %1279 = vmatpush2.bf16.msra.mxu0 0
          %1280 = vmatprep.subr.bf16.mxu0 0
          %1281 = vmatpush2.bf16.msra.mxu0 0
          %1282 = vmatprep.subr.bf16.mxu0 0
          %1283 = vmatpush2.bf16.msra.mxu0 0
          %1284 = vmatprep.subr.bf16.mxu0 0
          %1285 = vmatpush2.bf16.msra.mxu0 0
          %1286 = vmatprep.subr.bf16.mxu0 0
          %1287 = vmatpush2.bf16.msra.mxu0 0
          %1288 = vmatprep.subr.bf16.mxu0 0
          %1289 = vmatpush2.bf16.msra.mxu0 0
          %1290 = vmatprep.subr.bf16.mxu0 0
          %1291 = vmatpush2.bf16.msra.mxu0 0
          %1292 = vmatprep.mubr.bf16.mxu0 0
          %1293 = vmatmul.mubr.bf16.gmra.mxu0 %v1258
          %v1294 = vpop.f32.mrf.mxu0
          %v1295 = vadd.f32 %v1230, %v1294
          %v1296 = vpop.f32.mrf.mxu0
          %v1297 = vpop.f32.mrf.mxu0
          %v1298 = vpop.f32.mrf.mxu0
          %1299 = vdwg.mxu0
          %v1300 = vadd.f32 %v1147, %v1295
          %v1301 = vld [vmem:[%s11] sm:$0x1]
          %v1302 = vld [vmem:[%s12] sm:$0x1]
          %v1303 = vsel %vm547, %v1300, 0.0
          %1304 = vadd.xlane.f32.xlu0 %v1303
          %v1305 = vpop.xlane.xlu0 %1304
          %v1306 = vmul.f32 %v1305, %v1123
          %v1307 = vsub.f32 %v1300, %v1306
          %v1308 = vmul.f32 %v1307, %v1307
          %v1309 = vsel %vm547, %v1308, 0.0
          %1310 = vadd.xlane.f32.xlu0 %v1309
          %v1311 = vpop.xlane.xlu0 %1310
          %v1312 = vmul.f32 %v1311, %v1123
          %v1313 = vadd.f32 %v1312, 1e-05
          %v1314 = vrsqrt.pop %v1313
          %v1315 = vmul.f32 %v1307, %v1314
          %v1317 = vlaneseq
          %v1318 = vshrl.u32 %v1317, 7
          %v1319 = vsub.s32 0, %v1318
          %v1320 = vrot.slane %v1301, %v1319
          %v1322 = vmul.f32 %v1315, %v1320
          %v1324 = vlaneseq
          %v1325 = vshrl.u32 %v1324, 7
          %v1326 = vsub.s32 0, %v1325
          %v1327 = vrot.slane %v1302, %v1326
          %v1329 = vadd.f32 %v1322, %v1327
        $region101: #{tpu_custom_call.1} parent=71 // loop_footer
          %s521 = sadd.s32 1, %s517
        $region102: #{tpu_custom_call.1} parent=71 // loop_footer_branch
          %516 = sbr.rel target = $region98
        $region103: #{tpu_custom_call.1} parent=71 // loop_exit
          _
        %vm1330 = vcmask 261120
        %1331 = vst.msk [vmem:[%s509] sm:$0xff] %vm1330, %v522
        %s1332 = sand.u32 %s317, 1
        %s1333 = scalar_lea.sflag [#allocation4], %s1332
        %s1334 = sand.u32 %s317, 1
        %s1335 = smul.addr %s1334, 8
        %s1336 = scalar_lea.vmem [#allocation13], %s1335
        // Predicated region
        $region104: #{tpu_custom_call.1} parent=71 // pred_check
          %p1337 = pneg %p327
        $region105: #{tpu_custom_call.1} parent=71 // pred_check_branch
          %1339 = sbr.rel (%p1337) target = $region107
        $region106: #{tpu_custom_call.1} parent=71 // pred_region
          %s1341 = ssub.s32 128, 128
          %1342 = vsyncadd %s1333, %s1341
          %s1343 = smul.addr %s31, 128
          %s1344 = scalar_lea.hbm %s13, %s1343
          %s1346 = sshll.u32 %s1336, 4
          %s1347 = int_to_ptr.vmem [resolvable:$true] %s1346
          %1349 = dma.vmem_to_hbm [thread:$0]  %s1347, 128, %s1344, %s1333
        $region107: #{tpu_custom_call.1} parent=71 // pred_fallthru
          _
      $region72: #{tpu_custom_call.1} parent=5 // pred_fallthru
        _
      %p1350 = scmp.le.s32.totalorder 2, %s26
      // Predicated region
      $region108: #{tpu_custom_call.1} parent=5 // pred_check
        %p1351 = pneg %p1350
      $region109: #{tpu_custom_call.1} parent=5 // pred_check_branch
        %1353 = sbr.rel (%p1351) target = $region111
      $region110: #{tpu_custom_call.1} parent=5 // pred_region
        %s1354 = ssub.s32 %s26, 2
        // Predicated region
        $region112: #{tpu_custom_call.1} parent=110 // pred_check
          %p1355 = pneg %p333
        $region113: #{tpu_custom_call.1} parent=110 // pred_check_branch
          %1357 = sbr.rel (%p1355) target = $region115
        $region114: #{tpu_custom_call.1} parent=110 // pred_region
          %s1358 = sand.u32 %s318, 1
          %s1359 = scalar_lea.sflag [#allocation4], %s1358
          %s1360 = sand.u32 %s318, 1
          %s1361 = smul.addr %s1360, 8
          %s1362 = scalar_lea.vmem [#allocation13], %s1361
          %1363 = dma.done %s1359, 128
        $region115: #{tpu_custom_call.1} parent=110 // pred_fallthru
          _
      $region111: #{tpu_custom_call.1} parent=5 // pred_fallthru
        _
    $region6: #{tpu_custom_call.1} parent=1 // loop_footer
      %s30 = sadd.s32 1, %s26
    $region7: #{tpu_custom_call.1} parent=1 // loop_footer_branch
      %25 = sbr.rel target = $region3
    $region8: #{tpu_custom_call.1} parent=1 // loop_exit
      _
    %1364 = vsyncpa [#allocation3], 1
    %s1365 = scalar_lea.sflag [#allocation3], 1
    %1366 = vsyncpa %s1365, 1
    %1367 = vsyncpa [#allocation6], 1
    %1368 = vsyncpa [#allocation9], 1
    %1369 = vsyncpa [#allocation12], 1
    %1370 = vsyncpa [#allocation4], 1
    %s1371 = scalar_lea.sflag [#allocation4], 1
    %1372 = vsyncpa %s1371, 1

</llo_original>
